<compile_context>
chip_gen: v6e
topology: v6e:2x2x1
jax: 0.10.0
libtpu: 0.0.40
codegen_flags: <defaults>
</compile_context>

<pallas_src>
import functools

import numpy as np
import jax
import jax.numpy as jnp
from jax import lax
from jax.experimental import pallas as pl
from jax.experimental.pallas import tpu as pltpu


# ----------------------------------------------------------------------------
# Fused EDSR kernel
# ----------------------------------------------------------------------------
def _make_edsr_kernel(H, W, n_resblocks, res_scale, head_mode, tail_mode):
    HW = H * W
    PAD = W + 1  # flat zero-pad on each side of the (C, H*W) activation

    def conv3x3(a, w, b_col, col_masks, *, mode, relu=False):
        """3x3 'same' conv on a lane-dense activation a: (Cin, H*W) f32."""
        cin = a.shape[0]
        # Zero-pad once in VMEM/registers (replaces the per-layer HBM jnp.pad).
        zpad = jnp.zeros((cin, PAD), jnp.float32)
        e = jnp.concatenate([zpad, a, zpad], axis=1)        # (Cin, HW + 2*PAD)

        # 9 shifted taps.  Row (dy) out-of-range reads land in the zero pad;
        # column (dx) wrap-around is killed by the 0/1 column masks.
        pieces = []
        for k in range(9):
            dy, dx = k // 3 - 1, k % 3 - 1
            if dy == 0 and dx == 0:
                piece = a
            else:
                start = PAD + dy * W + dx
                piece = e[:, start:start + HW]              # lane shift (XLU)
            if dx != 0:
                piece = piece * col_masks[(dx + 1) // 2]    # dx=-1 -> 0, dx=+1 -> 1
            pieces.append(piece)

        if mode == "mxu":
            # One K = 9*Cin matmul on the MXU (bf16 operands, f32 accumulate).
            patches = jnp.concatenate(pieces, axis=0).astype(jnp.bfloat16)
            acc = jnp.dot(w, patches, preferred_element_type=jnp.float32)
        elif mode == "bcast":
            # Cin == 1 (head): pure-VPU broadcast multiply-accumulate per tap.
            cout = w.shape[0]                               # w: (Cout, 9) f32
            acc = jnp.zeros((cout, HW), jnp.float32)
            for k in range(9):
                acc = acc + w[:, k:k + 1] * pieces[k]
        else:  # "reduce"
            # Cout == 1 (tail): VPU multiply + XLU sublane reduction, no MXU.
            patches = jnp.concatenate(pieces, axis=0)       # (9*Cin, HW) f32
            acc = jnp.sum(patches * w, axis=0, keepdims=True)  # w: (9*Cin, 1)

        acc = acc + b_col                                   # f32 epilogue
        if relu:
            acc = jnp.maximum(acc, 0.0)
        return acc

    def kernel(x_ref, cmask_ref, head_w_ref, head_b_ref, mid_w_ref, mid_b_ref,
               tail_w_ref, tail_b_ref, o_ref):
        # Column-validity masks: loaded once, reused by every conv (hoisted).
        col_masks = (cmask_ref[0], cmask_ref[1])            # each (1, HW) f32

        x = x_ref[0]                                        # (Cin, HW) lane-dense

        # --- head ------------------------------------------------------------
        a = conv3x3(x, head_w_ref[...], head_b_ref[...], col_masks,
                    mode=head_mode)
        skip = a

        # --- body: ResBlocks, one conv, then the EDSR skip --------------------
        res = a
        for i in range(n_resblocks):
            y = conv3x3(res, mid_w_ref[2 * i], mid_b_ref[2 * i], col_masks,
                        mode="mxu", relu=True)
            res = conv3x3(y, mid_w_ref[2 * i + 1], mid_b_ref[2 * i + 1],
                          col_masks, mode="mxu") * jnp.float32(res_scale) + res
        res = conv3x3(res, mid_w_ref[2 * n_resblocks],
                      mid_b_ref[2 * n_resblocks], col_masks, mode="mxu") + skip

        # --- tail --------------------------------------------------------------
        out = conv3x3(res, tail_w_ref[...], tail_b_ref[...], col_masks,
                      mode=tail_mode)
        o_ref[0] = out.astype(o_ref.dtype)

    return kernel


# ----------------------------------------------------------------------------
# Host-side packing helpers
# ----------------------------------------------------------------------------
def _column_masks(H, W):
    """0/1 masks for the dx=-1 and dx=+1 taps (column validity), (2,1,H*W)."""
    col = np.tile(np.arange(W), H)
    masks = np.stack([(col >= 1), (col <= W - 2)]).astype(np.float32)
    return masks.reshape(2, 1, H * W)


def _pack_mxu(w_hwio, b):
    """(3,3,Cin,Cout) HWIO -> (Cout, 9*Cin) bf16 for the K=9*Cin MXU matmul."""
    kh, kw, cin, cout = w_hwio.shape
    w_mat = w_hwio.reshape(kh * kw * cin, cout).T.astype(jnp.bfloat16)
    return w_mat, b.reshape(cout, 1).astype(jnp.float32)


def _pack_bcast(w_hwio, b):
    """Cin==1 head conv -> (Cout, 9) f32 columns for the VPU MAC path."""
    kh, kw, cin, cout = w_hwio.shape
    w_mat = w_hwio.reshape(kh * kw, cout).T.astype(jnp.float32)
    return w_mat, b.reshape(cout, 1).astype(jnp.float32)


def _pack_reduce(w_hwio, b):
    """Cout==1 tail conv -> (9*Cin, 1) f32 column for the VPU+XLU reduce path."""
    kh, kw, cin, cout = w_hwio.shape
    w_col = w_hwio.reshape(kh * kw * cin, cout).astype(jnp.float32)
    return w_col, b.reshape(cout, 1).astype(jnp.float32)


# ----------------------------------------------------------------------------
# Public forward (NCHW in / NCHW out, same as the nn.Module)
# ----------------------------------------------------------------------------
def edsr_forward(x_nchw, params, res_scale):
    N, Cin, H, W = x_nchw.shape
    HW = H * W
    n_resblocks = len(params["blocks"])
    Cout = params["tail_w"].shape[-1]

    head_mode = "bcast" if Cin == 1 else "mxu"
    tail_mode = "reduce" if Cout == 1 else "mxu"

    head_w, head_b = (_pack_bcast if head_mode == "bcast" else _pack_mxu)(
        params["head_w"], params["head_b"])
    tail_w, tail_b = (_pack_reduce if tail_mode == "reduce" else _pack_mxu)(
        params["tail_w"], params["tail_b"])

    mids = []
    for (w1, b1, w2, b2) in params["blocks"]:
        mids.append(_pack_mxu(w1, b1))
        mids.append(_pack_mxu(w2, b2))
    mids.append(_pack_mxu(params["body_w"], params["body_b"]))
    mid_w = jnp.stack([w for w, _ in mids], axis=0)   # (n_mid, nf, 9*nf) bf16
    mid_b = jnp.stack([b for _, b in mids], axis=0)   # (n_mid, nf, 1) f32

    col_masks = jnp.asarray(_column_masks(H, W))      # (2, 1, HW) f32

    kernel = _make_edsr_kernel(H, W, n_resblocks, float(res_scale),
                               head_mode, tail_mode)

    x_flat = x_nchw.reshape(N, Cin, HW)               # NCHW -> lane-dense (C, H*W)

    def whole(a):                                     # full-array, grid-constant
        return pl.BlockSpec(a.shape, lambda n: (0,) * a.ndim)

    out_flat = pl.pallas_call(
        kernel,
        out_shape=jax.ShapeDtypeStruct((N, Cout, HW), x_nchw.dtype),
        grid=(N,),
        in_specs=[
            pl.BlockSpec((1, Cin, HW), lambda n: (n, 0, 0)),
            whole(col_masks), whole(head_w), whole(head_b),
            whole(mid_w), whole(mid_b), whole(tail_w), whole(tail_b),
        ],
        out_specs=pl.BlockSpec((1, Cout, HW), lambda n: (n, 0, 0)),
        compiler_params=pltpu.CompilerParams(
            dimension_semantics=("parallel",),
        ),
    )(x_flat, col_masks, head_w, head_b, mid_w, mid_b, tail_w, tail_b)

    return out_flat.reshape(N, Cout, H, W)


# ----------------------------------------------------------------------------
# Pure-JAX reference (lax.conv, f32 HIGHEST) for correctness check
# ----------------------------------------------------------------------------
def _ref_conv(x, w, b, relu=False):
    y = lax.conv_general_dilated(
        x, w, (1, 1), "SAME",
        dimension_numbers=("NHWC", "HWIO", "NHWC"),
        precision=lax.Precision.HIGHEST,
    ) + b
    return jnp.maximum(y, 0.0) if relu else y


def edsr_forward_ref(x_nchw, params, res_scale):
    x = jnp.transpose(x_nchw, (0, 2, 3, 1))
    x = _ref_conv(x, params["head_w"], params["head_b"])
    res = x
    for (w1, b1, w2, b2) in params["blocks"]:
        y = _ref_conv(res, w1, b1, relu=True)
        res = _ref_conv(y, w2, b2) * res_scale + res
    res = _ref_conv(res, params["body_w"], params["body_b"]) + x
    out = _ref_conv(res, params["tail_w"], params["tail_b"])
    return jnp.transpose(out, (0, 3, 1, 2))


# ----------------------------------------------------------------------------
# Deterministic parameter init (kaiming-uniform-ish, synthetic weights)
# ----------------------------------------------------------------------------
def init_params(key, n_resblocks, n_feats, in_channels, out_channels):
    def conv_init(k, cin, cout):
        kw, kb = jax.random.split(k)
        bound = 1.0 / jnp.sqrt(cin * 9.0)
        w = jax.random.uniform(kw, (3, 3, cin, cout), jnp.float32, -bound, bound)
        b = jax.random.uniform(kb, (cout,), jnp.float32, -bound, bound)
        return w, b

    keys = jax.random.split(key, 3 + 2 * n_resblocks)
    head_w, head_b = conv_init(keys[0], in_channels, n_feats)
    blocks = []
    for i in range(n_resblocks):
        w1, b1 = conv_init(keys[1 + 2 * i], n_feats, n_feats)
        w2, b2 = conv_init(keys[2 + 2 * i], n_feats, n_feats)
        blocks.append((w1, b1, w2, b2))
    body_w, body_b = conv_init(keys[1 + 2 * n_resblocks], n_feats, n_feats)
    tail_w, tail_b = conv_init(keys[2 + 2 * n_resblocks], n_feats, out_channels)
    return dict(head_w=head_w, head_b=head_b, blocks=blocks,
                body_w=body_w, body_b=body_b, tail_w=tail_w, tail_b=tail_b)


# ----------------------------------------------------------------------------
if __name__ == "__main__":
    # EDSR(dimension=2, n_resblocks=2, n_feats=8, res_scale=0.1,
    #      in_channels=1, out_channels=1, act='relu')
    N, Cin, H, W = 2, 1, 16, 16
    n_resblocks, n_feats, Cout = 2, 8, 1
    res_scale = 0.1

    key = jax.random.PRNGKey(0)
    kx, kp = jax.random.split(key)
    x = jax.random.normal(kx, (N, Cin, H, W), jnp.float32)
    params = init_params(kp, n_resblocks, n_feats, Cin, Cout)

    fwd = jax.jit(functools.partial(edsr_forward, res_scale=res_scale))
    out = jax.block_until_ready(fwd(x, params))

    ref = jax.block_until_ready(edsr_forward_ref(x, params, res_scale))
    assert out.shape == (N, Cout, H, W)
    # Body convs use bf16 MXU operands (f32 accumulate); tolerance is loosened
    # accordingly vs. the f32 HIGHEST-precision lax.conv reference.
    assert jnp.allclose(out, ref, rtol=2e-2, atol=2e-2), float(
        jnp.max(jnp.abs(out - ref)))

    print("KERNEL_OK")
</pallas_src>

<mosaic_0001>
module attributes {stable_mosaic.version = 11 : i64} {
  func.func @kernel(%arg0: i32, %arg1: memref<1x1x256xf32, #tpu.memory_space<vmem>>, %arg2: memref<2x1x256xf32, #tpu.memory_space<vmem>>, %arg3: memref<8x9xf32, #tpu.memory_space<vmem>>, %arg4: memref<8x1xf32, #tpu.memory_space<vmem>>, %arg5: memref<5x8x72xbf16, #tpu.memory_space<vmem>>, %arg6: memref<5x8x1xf32, #tpu.memory_space<vmem>>, %arg7: memref<72x1xf32, #tpu.memory_space<vmem>>, %arg8: memref<1x1xf32, #tpu.memory_space<vmem>>, %arg9: memref<1x1x256xf32, #tpu.memory_space<vmem>>) attributes {dimension_semantics = [#tpu.dimension_semantics<parallel>], iteration_bounds = array<i64: 2>, scalar_prefetch = 0 : i64, scratch_operands = 0 : i64, tpu.core_type = #tpu.core_type<tc>, window_params = [{transform_indices = @transform_0, window_bounds = array<i64: 1, 1, 256>}, {pipeline_mode = #tpu.pipeline_mode<synchronous>, transform_indices = @transform_1, window_bounds = array<i64: 2, 1, 256>}, {pipeline_mode = #tpu.pipeline_mode<synchronous>, transform_indices = @transform_2, window_bounds = array<i64: 8, 9>}, {pipeline_mode = #tpu.pipeline_mode<synchronous>, transform_indices = @transform_3, window_bounds = array<i64: 8, 1>}, {pipeline_mode = #tpu.pipeline_mode<synchronous>, transform_indices = @transform_4, window_bounds = array<i64: 5, 8, 72>}, {pipeline_mode = #tpu.pipeline_mode<synchronous>, transform_indices = @transform_5, window_bounds = array<i64: 5, 8, 1>}, {pipeline_mode = #tpu.pipeline_mode<synchronous>, transform_indices = @transform_6, window_bounds = array<i64: 72, 1>}, {pipeline_mode = #tpu.pipeline_mode<synchronous>, transform_indices = @transform_7, window_bounds = array<i64: 1, 1>}, {transform_indices = @transform_8, window_bounds = array<i64: 1, 1, 256>}]} {
    %c0 = arith.constant 0 : index
    %c0_0 = arith.constant 0 : index
    %c0_1 = arith.constant 0 : index
    %0 = vector.load %arg2[%c0, %c0_0, %c0_1] : memref<2x1x256xf32, #tpu.memory_space<vmem>>, vector<1x1x256xf32>
    %1 = vector.shape_cast %0 : vector<1x1x256xf32> to vector<1x256xf32>
    %c1 = arith.constant 1 : index
    %c0_2 = arith.constant 0 : index
    %c0_3 = arith.constant 0 : index
    %2 = vector.load %arg2[%c1, %c0_2, %c0_3] : memref<2x1x256xf32, #tpu.memory_space<vmem>>, vector<1x1x256xf32>
    %3 = vector.shape_cast %2 : vector<1x1x256xf32> to vector<1x256xf32>
    %c0_4 = arith.constant 0 : index
    %c0_5 = arith.constant 0 : index
    %c0_6 = arith.constant 0 : index
    %4 = vector.load %arg1[%c0_4, %c0_5, %c0_6] : memref<1x1x256xf32, #tpu.memory_space<vmem>>, vector<1x1x256xf32>
    %5 = vector.shape_cast %4 : vector<1x1x256xf32> to vector<1x256xf32>
    %c0_7 = arith.constant 0 : index
    %c0_8 = arith.constant 0 : index
    %6 = vector.load %arg3[%c0_7, %c0_8] : memref<8x9xf32, #tpu.memory_space<vmem>>, vector<8x9xf32>
    %c0_9 = arith.constant 0 : index
    %c0_10 = arith.constant 0 : index
    %7 = vector.load %arg4[%c0_9, %c0_10] : memref<8x1xf32, #tpu.memory_space<vmem>>, vector<8x1xf32>
    %cst = arith.constant 0.000000e+00 : f32
    %8 = vector.broadcast %cst : f32 to vector<1x17xf32>
    %9 = tpu.concatenate %8, %5, %8 in 1 : vector<1x17xf32>, vector<1x256xf32>, vector<1x17xf32> -> vector<1x290xf32>
    %10 = vector.extract_strided_slice %9 {offsets = [0, 0], sizes = [1, 256], strides = [1, 1]} : vector<1x290xf32> to vector<1x256xf32>
    %11 = arith.mulf %10, %1 : vector<1x256xf32>
    %12 = vector.extract_strided_slice %9 {offsets = [0, 1], sizes = [1, 256], strides = [1, 1]} : vector<1x290xf32> to vector<1x256xf32>
    %13 = vector.extract_strided_slice %9 {offsets = [0, 2], sizes = [1, 256], strides = [1, 1]} : vector<1x290xf32> to vector<1x256xf32>
    %14 = arith.mulf %13, %3 : vector<1x256xf32>
    %15 = vector.extract_strided_slice %9 {offsets = [0, 16], sizes = [1, 256], strides = [1, 1]} : vector<1x290xf32> to vector<1x256xf32>
    %16 = arith.mulf %15, %1 : vector<1x256xf32>
    %17 = vector.extract_strided_slice %9 {offsets = [0, 18], sizes = [1, 256], strides = [1, 1]} : vector<1x290xf32> to vector<1x256xf32>
    %18 = arith.mulf %17, %3 : vector<1x256xf32>
    %19 = vector.extract_strided_slice %9 {offsets = [0, 32], sizes = [1, 256], strides = [1, 1]} : vector<1x290xf32> to vector<1x256xf32>
    %20 = arith.mulf %19, %1 : vector<1x256xf32>
    %21 = vector.extract_strided_slice %9 {offsets = [0, 33], sizes = [1, 256], strides = [1, 1]} : vector<1x290xf32> to vector<1x256xf32>
    %22 = vector.extract_strided_slice %9 {offsets = [0, 34], sizes = [1, 256], strides = [1, 1]} : vector<1x290xf32> to vector<1x256xf32>
    %23 = arith.mulf %22, %3 : vector<1x256xf32>
    %cst_11 = arith.constant 0.000000e+00 : f32
    %24 = vector.broadcast %cst_11 : f32 to vector<8x256xf32>
    %25 = vector.extract_strided_slice %6 {offsets = [0, 0], sizes = [8, 1], strides = [1, 1]} : vector<8x9xf32> to vector<8x1xf32>
    %26 = vector.broadcast %25 : vector<8x1xf32> to vector<8x256xf32>
    %27 = vector.broadcast %11 : vector<1x256xf32> to vector<8x256xf32>
    %28 = arith.mulf %26, %27 : vector<8x256xf32>
    %29 = arith.addf %24, %28 : vector<8x256xf32>
    %30 = vector.extract_strided_slice %6 {offsets = [0, 1], sizes = [8, 1], strides = [1, 1]} : vector<8x9xf32> to vector<8x1xf32>
    %31 = vector.broadcast %30 : vector<8x1xf32> to vector<8x256xf32>
    %32 = vector.broadcast %12 : vector<1x256xf32> to vector<8x256xf32>
    %33 = arith.mulf %31, %32 : vector<8x256xf32>
    %34 = arith.addf %29, %33 : vector<8x256xf32>
    %35 = vector.extract_strided_slice %6 {offsets = [0, 2], sizes = [8, 1], strides = [1, 1]} : vector<8x9xf32> to vector<8x1xf32>
    %36 = vector.broadcast %35 : vector<8x1xf32> to vector<8x256xf32>
    %37 = vector.broadcast %14 : vector<1x256xf32> to vector<8x256xf32>
    %38 = arith.mulf %36, %37 : vector<8x256xf32>
    %39 = arith.addf %34, %38 : vector<8x256xf32>
    %40 = vector.extract_strided_slice %6 {offsets = [0, 3], sizes = [8, 1], strides = [1, 1]} : vector<8x9xf32> to vector<8x1xf32>
    %41 = vector.broadcast %40 : vector<8x1xf32> to vector<8x256xf32>
    %42 = vector.broadcast %16 : vector<1x256xf32> to vector<8x256xf32>
    %43 = arith.mulf %41, %42 : vector<8x256xf32>
    %44 = arith.addf %39, %43 : vector<8x256xf32>
    %45 = vector.extract_strided_slice %6 {offsets = [0, 4], sizes = [8, 1], strides = [1, 1]} : vector<8x9xf32> to vector<8x1xf32>
    %46 = vector.broadcast %45 : vector<8x1xf32> to vector<8x256xf32>
    %47 = vector.broadcast %5 : vector<1x256xf32> to vector<8x256xf32>
    %48 = arith.mulf %46, %47 : vector<8x256xf32>
    %49 = arith.addf %44, %48 : vector<8x256xf32>
    %50 = vector.extract_strided_slice %6 {offsets = [0, 5], sizes = [8, 1], strides = [1, 1]} : vector<8x9xf32> to vector<8x1xf32>
    %51 = vector.broadcast %50 : vector<8x1xf32> to vector<8x256xf32>
    %52 = vector.broadcast %18 : vector<1x256xf32> to vector<8x256xf32>
    %53 = arith.mulf %51, %52 : vector<8x256xf32>
    %54 = arith.addf %49, %53 : vector<8x256xf32>
    %55 = vector.extract_strided_slice %6 {offsets = [0, 6], sizes = [8, 1], strides = [1, 1]} : vector<8x9xf32> to vector<8x1xf32>
    %56 = vector.broadcast %55 : vector<8x1xf32> to vector<8x256xf32>
    %57 = vector.broadcast %20 : vector<1x256xf32> to vector<8x256xf32>
    %58 = arith.mulf %56, %57 : vector<8x256xf32>
    %59 = arith.addf %54, %58 : vector<8x256xf32>
    %60 = vector.extract_strided_slice %6 {offsets = [0, 7], sizes = [8, 1], strides = [1, 1]} : vector<8x9xf32> to vector<8x1xf32>
    %61 = vector.broadcast %60 : vector<8x1xf32> to vector<8x256xf32>
    %62 = vector.broadcast %21 : vector<1x256xf32> to vector<8x256xf32>
    %63 = arith.mulf %61, %62 : vector<8x256xf32>
    %64 = arith.addf %59, %63 : vector<8x256xf32>
    %65 = vector.extract_strided_slice %6 {offsets = [0, 8], sizes = [8, 1], strides = [1, 1]} : vector<8x9xf32> to vector<8x1xf32>
    %66 = vector.broadcast %65 : vector<8x1xf32> to vector<8x256xf32>
    %67 = vector.broadcast %23 : vector<1x256xf32> to vector<8x256xf32>
    %68 = arith.mulf %66, %67 : vector<8x256xf32>
    %69 = arith.addf %64, %68 : vector<8x256xf32>
    %70 = vector.broadcast %7 : vector<8x1xf32> to vector<8x256xf32>
    %71 = arith.addf %69, %70 : vector<8x256xf32>
    %c0_12 = arith.constant 0 : index
    %c0_13 = arith.constant 0 : index
    %c0_14 = arith.constant 0 : index
    %72 = vector.load %arg5[%c0_12, %c0_13, %c0_14] : memref<5x8x72xbf16, #tpu.memory_space<vmem>>, vector<1x8x72xbf16>
    %73 = vector.shape_cast %72 : vector<1x8x72xbf16> to vector<8x72xbf16>
    %c0_15 = arith.constant 0 : index
    %c0_16 = arith.constant 0 : index
    %c0_17 = arith.constant 0 : index
    %74 = vector.load %arg6[%c0_15, %c0_16, %c0_17] : memref<5x8x1xf32, #tpu.memory_space<vmem>>, vector<1x8x1xf32>
    %75 = vector.shape_cast %74 : vector<1x8x1xf32> to vector<8x1xf32>
    %cst_18 = arith.constant 0.000000e+00 : f32
    %76 = vector.broadcast %cst_18 : f32 to vector<8x17xf32>
    %77 = tpu.concatenate %76, %71, %76 in 1 : vector<8x17xf32>, vector<8x256xf32>, vector<8x17xf32> -> vector<8x290xf32>
    %78 = vector.extract_strided_slice %77 {offsets = [0, 0], sizes = [8, 256], strides = [1, 1]} : vector<8x290xf32> to vector<8x256xf32>
    %79 = vector.broadcast %1 : vector<1x256xf32> to vector<8x256xf32>
    %80 = arith.mulf %78, %79 : vector<8x256xf32>
    %81 = vector.extract_strided_slice %77 {offsets = [0, 1], sizes = [8, 256], strides = [1, 1]} : vector<8x290xf32> to vector<8x256xf32>
    %82 = vector.extract_strided_slice %77 {offsets = [0, 2], sizes = [8, 256], strides = [1, 1]} : vector<8x290xf32> to vector<8x256xf32>
    %83 = vector.broadcast %3 : vector<1x256xf32> to vector<8x256xf32>
    %84 = arith.mulf %82, %83 : vector<8x256xf32>
    %85 = vector.extract_strided_slice %77 {offsets = [0, 16], sizes = [8, 256], strides = [1, 1]} : vector<8x290xf32> to vector<8x256xf32>
    %86 = vector.broadcast %1 : vector<1x256xf32> to vector<8x256xf32>
    %87 = arith.mulf %85, %86 : vector<8x256xf32>
    %88 = vector.extract_strided_slice %77 {offsets = [0, 18], sizes = [8, 256], strides = [1, 1]} : vector<8x290xf32> to vector<8x256xf32>
    %89 = vector.broadcast %3 : vector<1x256xf32> to vector<8x256xf32>
    %90 = arith.mulf %88, %89 : vector<8x256xf32>
    %91 = vector.extract_strided_slice %77 {offsets = [0, 32], sizes = [8, 256], strides = [1, 1]} : vector<8x290xf32> to vector<8x256xf32>
    %92 = vector.broadcast %1 : vector<1x256xf32> to vector<8x256xf32>
    %93 = arith.mulf %91, %92 : vector<8x256xf32>
    %94 = vector.extract_strided_slice %77 {offsets = [0, 33], sizes = [8, 256], strides = [1, 1]} : vector<8x290xf32> to vector<8x256xf32>
    %95 = vector.extract_strided_slice %77 {offsets = [0, 34], sizes = [8, 256], strides = [1, 1]} : vector<8x290xf32> to vector<8x256xf32>
    %96 = vector.broadcast %3 : vector<1x256xf32> to vector<8x256xf32>
    %97 = arith.mulf %95, %96 : vector<8x256xf32>
    %98 = tpu.concatenate %80, %81, %84, %87, %71, %90, %93, %94, %97 in 0 : vector<8x256xf32>, vector<8x256xf32>, vector<8x256xf32>, vector<8x256xf32>, vector<8x256xf32>, vector<8x256xf32>, vector<8x256xf32>, vector<8x256xf32>, vector<8x256xf32> -> vector<72x256xf32>
    %99 = arith.truncf %98 : vector<72x256xf32> to vector<72x256xbf16>
    %cst_19 = arith.constant dense<0.000000e+00> : vector<8x256xf32>
    %100 = tpu.matmul %73, %99, %cst_19 {dimension_numbers = #tpu.dot_dimension_numbers<[1], [0], [0], [1], [0, 0, 1, 1], [], []>} : vector<8x72xbf16>, vector<72x256xbf16>, vector<8x256xf32> -> vector<8x256xf32>
    %101 = vector.broadcast %75 : vector<8x1xf32> to vector<8x256xf32>
    %102 = arith.addf %100, %101 : vector<8x256xf32>
    %cst_20 = arith.constant 0.000000e+00 : f32
    %103 = vector.broadcast %cst_20 : f32 to vector<8x256xf32>
    %104 = arith.maximumf %102, %103 : vector<8x256xf32>
    %c1_21 = arith.constant 1 : index
    %c0_22 = arith.constant 0 : index
    %c0_23 = arith.constant 0 : index
    %105 = vector.load %arg5[%c1_21, %c0_22, %c0_23] : memref<5x8x72xbf16, #tpu.memory_space<vmem>>, vector<1x8x72xbf16>
    %106 = vector.shape_cast %105 : vector<1x8x72xbf16> to vector<8x72xbf16>
    %c1_24 = arith.constant 1 : index
    %c0_25 = arith.constant 0 : index
    %c0_26 = arith.constant 0 : index
    %107 = vector.load %arg6[%c1_24, %c0_25, %c0_26] : memref<5x8x1xf32, #tpu.memory_space<vmem>>, vector<1x8x1xf32>
    %108 = vector.shape_cast %107 : vector<1x8x1xf32> to vector<8x1xf32>
    %cst_27 = arith.constant 0.000000e+00 : f32
    %109 = vector.broadcast %cst_27 : f32 to vector<8x17xf32>
    %110 = tpu.concatenate %109, %104, %109 in 1 : vector<8x17xf32>, vector<8x256xf32>, vector<8x17xf32> -> vector<8x290xf32>
    %111 = vector.extract_strided_slice %110 {offsets = [0, 0], sizes = [8, 256], strides = [1, 1]} : vector<8x290xf32> to vector<8x256xf32>
    %112 = vector.broadcast %1 : vector<1x256xf32> to vector<8x256xf32>
    %113 = arith.mulf %111, %112 : vector<8x256xf32>
    %114 = vector.extract_strided_slice %110 {offsets = [0, 1], sizes = [8, 256], strides = [1, 1]} : vector<8x290xf32> to vector<8x256xf32>
    %115 = vector.extract_strided_slice %110 {offsets = [0, 2], sizes = [8, 256], strides = [1, 1]} : vector<8x290xf32> to vector<8x256xf32>
    %116 = vector.broadcast %3 : vector<1x256xf32> to vector<8x256xf32>
    %117 = arith.mulf %115, %116 : vector<8x256xf32>
    %118 = vector.extract_strided_slice %110 {offsets = [0, 16], sizes = [8, 256], strides = [1, 1]} : vector<8x290xf32> to vector<8x256xf32>
    %119 = vector.broadcast %1 : vector<1x256xf32> to vector<8x256xf32>
    %120 = arith.mulf %118, %119 : vector<8x256xf32>
    %121 = vector.extract_strided_slice %110 {offsets = [0, 18], sizes = [8, 256], strides = [1, 1]} : vector<8x290xf32> to vector<8x256xf32>
    %122 = vector.broadcast %3 : vector<1x256xf32> to vector<8x256xf32>
    %123 = arith.mulf %121, %122 : vector<8x256xf32>
    %124 = vector.extract_strided_slice %110 {offsets = [0, 32], sizes = [8, 256], strides = [1, 1]} : vector<8x290xf32> to vector<8x256xf32>
    %125 = vector.broadcast %1 : vector<1x256xf32> to vector<8x256xf32>
    %126 = arith.mulf %124, %125 : vector<8x256xf32>
    %127 = vector.extract_strided_slice %110 {offsets = [0, 33], sizes = [8, 256], strides = [1, 1]} : vector<8x290xf32> to vector<8x256xf32>
    %128 = vector.extract_strided_slice %110 {offsets = [0, 34], sizes = [8, 256], strides = [1, 1]} : vector<8x290xf32> to vector<8x256xf32>
    %129 = vector.broadcast %3 : vector<1x256xf32> to vector<8x256xf32>
    %130 = arith.mulf %128, %129 : vector<8x256xf32>
    %131 = tpu.concatenate %113, %114, %117, %120, %104, %123, %126, %127, %130 in 0 : vector<8x256xf32>, vector<8x256xf32>, vector<8x256xf32>, vector<8x256xf32>, vector<8x256xf32>, vector<8x256xf32>, vector<8x256xf32>, vector<8x256xf32>, vector<8x256xf32> -> vector<72x256xf32>
    %132 = arith.truncf %131 : vector<72x256xf32> to vector<72x256xbf16>
    %cst_28 = arith.constant dense<0.000000e+00> : vector<8x256xf32>
    %133 = tpu.matmul %106, %132, %cst_28 {dimension_numbers = #tpu.dot_dimension_numbers<[1], [0], [0], [1], [0, 0, 1, 1], [], []>} : vector<8x72xbf16>, vector<72x256xbf16>, vector<8x256xf32> -> vector<8x256xf32>
    %134 = vector.broadcast %108 : vector<8x1xf32> to vector<8x256xf32>
    %135 = arith.addf %133, %134 : vector<8x256xf32>
    %cst_29 = arith.constant 1.000000e-01 : f32
    %136 = vector.broadcast %cst_29 : f32 to vector<8x256xf32>
    %137 = arith.mulf %135, %136 : vector<8x256xf32>
    %138 = arith.addf %137, %71 : vector<8x256xf32>
    %c2 = arith.constant 2 : index
    %c0_30 = arith.constant 0 : index
    %c0_31 = arith.constant 0 : index
    %139 = vector.load %arg5[%c2, %c0_30, %c0_31] : memref<5x8x72xbf16, #tpu.memory_space<vmem>>, vector<1x8x72xbf16>
    %140 = vector.shape_cast %139 : vector<1x8x72xbf16> to vector<8x72xbf16>
    %c2_32 = arith.constant 2 : index
    %c0_33 = arith.constant 0 : index
    %c0_34 = arith.constant 0 : index
    %141 = vector.load %arg6[%c2_32, %c0_33, %c0_34] : memref<5x8x1xf32, #tpu.memory_space<vmem>>, vector<1x8x1xf32>
    %142 = vector.shape_cast %141 : vector<1x8x1xf32> to vector<8x1xf32>
    %cst_35 = arith.constant 0.000000e+00 : f32
    %143 = vector.broadcast %cst_35 : f32 to vector<8x17xf32>
    %144 = tpu.concatenate %143, %138, %143 in 1 : vector<8x17xf32>, vector<8x256xf32>, vector<8x17xf32> -> vector<8x290xf32>
    %145 = vector.extract_strided_slice %144 {offsets = [0, 0], sizes = [8, 256], strides = [1, 1]} : vector<8x290xf32> to vector<8x256xf32>
    %146 = vector.broadcast %1 : vector<1x256xf32> to vector<8x256xf32>
    %147 = arith.mulf %145, %146 : vector<8x256xf32>
    %148 = vector.extract_strided_slice %144 {offsets = [0, 1], sizes = [8, 256], strides = [1, 1]} : vector<8x290xf32> to vector<8x256xf32>
    %149 = vector.extract_strided_slice %144 {offsets = [0, 2], sizes = [8, 256], strides = [1, 1]} : vector<8x290xf32> to vector<8x256xf32>
    %150 = vector.broadcast %3 : vector<1x256xf32> to vector<8x256xf32>
    %151 = arith.mulf %149, %150 : vector<8x256xf32>
    %152 = vector.extract_strided_slice %144 {offsets = [0, 16], sizes = [8, 256], strides = [1, 1]} : vector<8x290xf32> to vector<8x256xf32>
    %153 = vector.broadcast %1 : vector<1x256xf32> to vector<8x256xf32>
    %154 = arith.mulf %152, %153 : vector<8x256xf32>
    %155 = vector.extract_strided_slice %144 {offsets = [0, 18], sizes = [8, 256], strides = [1, 1]} : vector<8x290xf32> to vector<8x256xf32>
    %156 = vector.broadcast %3 : vector<1x256xf32> to vector<8x256xf32>
    %157 = arith.mulf %155, %156 : vector<8x256xf32>
    %158 = vector.extract_strided_slice %144 {offsets = [0, 32], sizes = [8, 256], strides = [1, 1]} : vector<8x290xf32> to vector<8x256xf32>
    %159 = vector.broadcast %1 : vector<1x256xf32> to vector<8x256xf32>
    %160 = arith.mulf %158, %159 : vector<8x256xf32>
    %161 = vector.extract_strided_slice %144 {offsets = [0, 33], sizes = [8, 256], strides = [1, 1]} : vector<8x290xf32> to vector<8x256xf32>
    %162 = vector.extract_strided_slice %144 {offsets = [0, 34], sizes = [8, 256], strides = [1, 1]} : vector<8x290xf32> to vector<8x256xf32>
    %163 = vector.broadcast %3 : vector<1x256xf32> to vector<8x256xf32>
    %164 = arith.mulf %162, %163 : vector<8x256xf32>
    %165 = tpu.concatenate %147, %148, %151, %154, %138, %157, %160, %161, %164 in 0 : vector<8x256xf32>, vector<8x256xf32>, vector<8x256xf32>, vector<8x256xf32>, vector<8x256xf32>, vector<8x256xf32>, vector<8x256xf32>, vector<8x256xf32>, vector<8x256xf32> -> vector<72x256xf32>
    %166 = arith.truncf %165 : vector<72x256xf32> to vector<72x256xbf16>
    %cst_36 = arith.constant dense<0.000000e+00> : vector<8x256xf32>
    %167 = tpu.matmul %140, %166, %cst_36 {dimension_numbers = #tpu.dot_dimension_numbers<[1], [0], [0], [1], [0, 0, 1, 1], [], []>} : vector<8x72xbf16>, vector<72x256xbf16>, vector<8x256xf32> -> vector<8x256xf32>
    %168 = vector.broadcast %142 : vector<8x1xf32> to vector<8x256xf32>
    %169 = arith.addf %167, %168 : vector<8x256xf32>
    %cst_37 = arith.constant 0.000000e+00 : f32
    %170 = vector.broadcast %cst_37 : f32 to vector<8x256xf32>
    %171 = arith.maximumf %169, %170 : vector<8x256xf32>
    %c3 = arith.constant 3 : index
    %c0_38 = arith.constant 0 : index
    %c0_39 = arith.constant 0 : index
    %172 = vector.load %arg5[%c3, %c0_38, %c0_39] : memref<5x8x72xbf16, #tpu.memory_space<vmem>>, vector<1x8x72xbf16>
    %173 = vector.shape_cast %172 : vector<1x8x72xbf16> to vector<8x72xbf16>
    %c3_40 = arith.constant 3 : index
    %c0_41 = arith.constant 0 : index
    %c0_42 = arith.constant 0 : index
    %174 = vector.load %arg6[%c3_40, %c0_41, %c0_42] : memref<5x8x1xf32, #tpu.memory_space<vmem>>, vector<1x8x1xf32>
    %175 = vector.shape_cast %174 : vector<1x8x1xf32> to vector<8x1xf32>
    %cst_43 = arith.constant 0.000000e+00 : f32
    %176 = vector.broadcast %cst_43 : f32 to vector<8x17xf32>
    %177 = tpu.concatenate %176, %171, %176 in 1 : vector<8x17xf32>, vector<8x256xf32>, vector<8x17xf32> -> vector<8x290xf32>
    %178 = vector.extract_strided_slice %177 {offsets = [0, 0], sizes = [8, 256], strides = [1, 1]} : vector<8x290xf32> to vector<8x256xf32>
    %179 = vector.broadcast %1 : vector<1x256xf32> to vector<8x256xf32>
    %180 = arith.mulf %178, %179 : vector<8x256xf32>
    %181 = vector.extract_strided_slice %177 {offsets = [0, 1], sizes = [8, 256], strides = [1, 1]} : vector<8x290xf32> to vector<8x256xf32>
    %182 = vector.extract_strided_slice %177 {offsets = [0, 2], sizes = [8, 256], strides = [1, 1]} : vector<8x290xf32> to vector<8x256xf32>
    %183 = vector.broadcast %3 : vector<1x256xf32> to vector<8x256xf32>
    %184 = arith.mulf %182, %183 : vector<8x256xf32>
    %185 = vector.extract_strided_slice %177 {offsets = [0, 16], sizes = [8, 256], strides = [1, 1]} : vector<8x290xf32> to vector<8x256xf32>
    %186 = vector.broadcast %1 : vector<1x256xf32> to vector<8x256xf32>
    %187 = arith.mulf %185, %186 : vector<8x256xf32>
    %188 = vector.extract_strided_slice %177 {offsets = [0, 18], sizes = [8, 256], strides = [1, 1]} : vector<8x290xf32> to vector<8x256xf32>
    %189 = vector.broadcast %3 : vector<1x256xf32> to vector<8x256xf32>
    %190 = arith.mulf %188, %189 : vector<8x256xf32>
    %191 = vector.extract_strided_slice %177 {offsets = [0, 32], sizes = [8, 256], strides = [1, 1]} : vector<8x290xf32> to vector<8x256xf32>
    %192 = vector.broadcast %1 : vector<1x256xf32> to vector<8x256xf32>
    %193 = arith.mulf %191, %192 : vector<8x256xf32>
    %194 = vector.extract_strided_slice %177 {offsets = [0, 33], sizes = [8, 256], strides = [1, 1]} : vector<8x290xf32> to vector<8x256xf32>
    %195 = vector.extract_strided_slice %177 {offsets = [0, 34], sizes = [8, 256], strides = [1, 1]} : vector<8x290xf32> to vector<8x256xf32>
    %196 = vector.broadcast %3 : vector<1x256xf32> to vector<8x256xf32>
    %197 = arith.mulf %195, %196 : vector<8x256xf32>
    %198 = tpu.concatenate %180, %181, %184, %187, %171, %190, %193, %194, %197 in 0 : vector<8x256xf32>, vector<8x256xf32>, vector<8x256xf32>, vector<8x256xf32>, vector<8x256xf32>, vector<8x256xf32>, vector<8x256xf32>, vector<8x256xf32>, vector<8x256xf32> -> vector<72x256xf32>
    %199 = arith.truncf %198 : vector<72x256xf32> to vector<72x256xbf16>
    %cst_44 = arith.constant dense<0.000000e+00> : vector<8x256xf32>
    %200 = tpu.matmul %173, %199, %cst_44 {dimension_numbers = #tpu.dot_dimension_numbers<[1], [0], [0], [1], [0, 0, 1, 1], [], []>} : vector<8x72xbf16>, vector<72x256xbf16>, vector<8x256xf32> -> vector<8x256xf32>
    %201 = vector.broadcast %175 : vector<8x1xf32> to vector<8x256xf32>
    %202 = arith.addf %200, %201 : vector<8x256xf32>
    %cst_45 = arith.constant 1.000000e-01 : f32
    %203 = vector.broadcast %cst_45 : f32 to vector<8x256xf32>
    %204 = arith.mulf %202, %203 : vector<8x256xf32>
    %205 = arith.addf %204, %138 : vector<8x256xf32>
    %c4 = arith.constant 4 : index
    %c0_46 = arith.constant 0 : index
    %c0_47 = arith.constant 0 : index
    %206 = vector.load %arg5[%c4, %c0_46, %c0_47] : memref<5x8x72xbf16, #tpu.memory_space<vmem>>, vector<1x8x72xbf16>
    %207 = vector.shape_cast %206 : vector<1x8x72xbf16> to vector<8x72xbf16>
    %c4_48 = arith.constant 4 : index
    %c0_49 = arith.constant 0 : index
    %c0_50 = arith.constant 0 : index
    %208 = vector.load %arg6[%c4_48, %c0_49, %c0_50] : memref<5x8x1xf32, #tpu.memory_space<vmem>>, vector<1x8x1xf32>
    %209 = vector.shape_cast %208 : vector<1x8x1xf32> to vector<8x1xf32>
    %cst_51 = arith.constant 0.000000e+00 : f32
    %210 = vector.broadcast %cst_51 : f32 to vector<8x17xf32>
    %211 = tpu.concatenate %210, %205, %210 in 1 : vector<8x17xf32>, vector<8x256xf32>, vector<8x17xf32> -> vector<8x290xf32>
    %212 = vector.extract_strided_slice %211 {offsets = [0, 0], sizes = [8, 256], strides = [1, 1]} : vector<8x290xf32> to vector<8x256xf32>
    %213 = vector.broadcast %1 : vector<1x256xf32> to vector<8x256xf32>
    %214 = arith.mulf %212, %213 : vector<8x256xf32>
    %215 = vector.extract_strided_slice %211 {offsets = [0, 1], sizes = [8, 256], strides = [1, 1]} : vector<8x290xf32> to vector<8x256xf32>
    %216 = vector.extract_strided_slice %211 {offsets = [0, 2], sizes = [8, 256], strides = [1, 1]} : vector<8x290xf32> to vector<8x256xf32>
    %217 = vector.broadcast %3 : vector<1x256xf32> to vector<8x256xf32>
    %218 = arith.mulf %216, %217 : vector<8x256xf32>
    %219 = vector.extract_strided_slice %211 {offsets = [0, 16], sizes = [8, 256], strides = [1, 1]} : vector<8x290xf32> to vector<8x256xf32>
    %220 = vector.broadcast %1 : vector<1x256xf32> to vector<8x256xf32>
    %221 = arith.mulf %219, %220 : vector<8x256xf32>
    %222 = vector.extract_strided_slice %211 {offsets = [0, 18], sizes = [8, 256], strides = [1, 1]} : vector<8x290xf32> to vector<8x256xf32>
    %223 = vector.broadcast %3 : vector<1x256xf32> to vector<8x256xf32>
    %224 = arith.mulf %222, %223 : vector<8x256xf32>
    %225 = vector.extract_strided_slice %211 {offsets = [0, 32], sizes = [8, 256], strides = [1, 1]} : vector<8x290xf32> to vector<8x256xf32>
    %226 = vector.broadcast %1 : vector<1x256xf32> to vector<8x256xf32>
    %227 = arith.mulf %225, %226 : vector<8x256xf32>
    %228 = vector.extract_strided_slice %211 {offsets = [0, 33], sizes = [8, 256], strides = [1, 1]} : vector<8x290xf32> to vector<8x256xf32>
    %229 = vector.extract_strided_slice %211 {offsets = [0, 34], sizes = [8, 256], strides = [1, 1]} : vector<8x290xf32> to vector<8x256xf32>
    %230 = vector.broadcast %3 : vector<1x256xf32> to vector<8x256xf32>
    %231 = arith.mulf %229, %230 : vector<8x256xf32>
    %232 = tpu.concatenate %214, %215, %218, %221, %205, %224, %227, %228, %231 in 0 : vector<8x256xf32>, vector<8x256xf32>, vector<8x256xf32>, vector<8x256xf32>, vector<8x256xf32>, vector<8x256xf32>, vector<8x256xf32>, vector<8x256xf32>, vector<8x256xf32> -> vector<72x256xf32>
    %233 = arith.truncf %232 : vector<72x256xf32> to vector<72x256xbf16>
    %cst_52 = arith.constant dense<0.000000e+00> : vector<8x256xf32>
    %234 = tpu.matmul %207, %233, %cst_52 {dimension_numbers = #tpu.dot_dimension_numbers<[1], [0], [0], [1], [0, 0, 1, 1], [], []>} : vector<8x72xbf16>, vector<72x256xbf16>, vector<8x256xf32> -> vector<8x256xf32>
    %235 = vector.broadcast %209 : vector<8x1xf32> to vector<8x256xf32>
    %236 = arith.addf %234, %235 : vector<8x256xf32>
    %237 = arith.addf %236, %71 : vector<8x256xf32>
    %c0_53 = arith.constant 0 : index
    %c0_54 = arith.constant 0 : index
    %238 = vector.load %arg7[%c0_53, %c0_54] : memref<72x1xf32, #tpu.memory_space<vmem>>, vector<72x1xf32>
    %c0_55 = arith.constant 0 : index
    %c0_56 = arith.constant 0 : index
    %239 = vector.load %arg8[%c0_55, %c0_56] : memref<1x1xf32, #tpu.memory_space<vmem>>, vector<1x1xf32>
    %cst_57 = arith.constant 0.000000e+00 : f32
    %240 = vector.broadcast %cst_57 : f32 to vector<8x17xf32>
    %241 = tpu.concatenate %240, %237, %240 in 1 : vector<8x17xf32>, vector<8x256xf32>, vector<8x17xf32> -> vector<8x290xf32>
    %242 = vector.extract_strided_slice %241 {offsets = [0, 0], sizes = [8, 256], strides = [1, 1]} : vector<8x290xf32> to vector<8x256xf32>
    %243 = vector.broadcast %1 : vector<1x256xf32> to vector<8x256xf32>
    %244 = arith.mulf %242, %243 : vector<8x256xf32>
    %245 = vector.extract_strided_slice %241 {offsets = [0, 1], sizes = [8, 256], strides = [1, 1]} : vector<8x290xf32> to vector<8x256xf32>
    %246 = vector.extract_strided_slice %241 {offsets = [0, 2], sizes = [8, 256], strides = [1, 1]} : vector<8x290xf32> to vector<8x256xf32>
    %247 = vector.broadcast %3 : vector<1x256xf32> to vector<8x256xf32>
    %248 = arith.mulf %246, %247 : vector<8x256xf32>
    %249 = vector.extract_strided_slice %241 {offsets = [0, 16], sizes = [8, 256], strides = [1, 1]} : vector<8x290xf32> to vector<8x256xf32>
    %250 = vector.broadcast %1 : vector<1x256xf32> to vector<8x256xf32>
    %251 = arith.mulf %249, %250 : vector<8x256xf32>
    %252 = vector.extract_strided_slice %241 {offsets = [0, 18], sizes = [8, 256], strides = [1, 1]} : vector<8x290xf32> to vector<8x256xf32>
    %253 = vector.broadcast %3 : vector<1x256xf32> to vector<8x256xf32>
    %254 = arith.mulf %252, %253 : vector<8x256xf32>
    %255 = vector.extract_strided_slice %241 {offsets = [0, 32], sizes = [8, 256], strides = [1, 1]} : vector<8x290xf32> to vector<8x256xf32>
    %256 = vector.broadcast %1 : vector<1x256xf32> to vector<8x256xf32>
    %257 = arith.mulf %255, %256 : vector<8x256xf32>
    %258 = vector.extract_strided_slice %241 {offsets = [0, 33], sizes = [8, 256], strides = [1, 1]} : vector<8x290xf32> to vector<8x256xf32>
    %259 = vector.extract_strided_slice %241 {offsets = [0, 34], sizes = [8, 256], strides = [1, 1]} : vector<8x290xf32> to vector<8x256xf32>
    %260 = vector.broadcast %3 : vector<1x256xf32> to vector<8x256xf32>
    %261 = arith.mulf %259, %260 : vector<8x256xf32>
    %262 = tpu.concatenate %244, %245, %248, %251, %237, %254, %257, %258, %261 in 0 : vector<8x256xf32>, vector<8x256xf32>, vector<8x256xf32>, vector<8x256xf32>, vector<8x256xf32>, vector<8x256xf32>, vector<8x256xf32>, vector<8x256xf32>, vector<8x256xf32> -> vector<72x256xf32>
    %263 = vector.broadcast %238 : vector<72x1xf32> to vector<72x256xf32>
    %264 = arith.mulf %262, %263 : vector<72x256xf32>
    %cst_58 = arith.constant dense<0.000000e+00> : vector<256xf32>
    %265 = vector.multi_reduction <add>, %264, %cst_58 [0] : vector<72x256xf32> to vector<256xf32>
    %266 = vector.shape_cast %265 : vector<256xf32> to vector<1x256xf32>
    %267 = vector.broadcast %239 : vector<1x1xf32> to vector<1x256xf32>
    %268 = arith.addf %266, %267 : vector<1x256xf32>
    %c0_59 = arith.constant 0 : index
    %c0_60 = arith.constant 0 : index
    %c0_61 = arith.constant 0 : index
    %269 = vector.load %arg9[%c0_59, %c0_60, %c0_61] : memref<1x1x256xf32, #tpu.memory_space<vmem>>, vector<1x1x256xf32>
    %270 = vector.shape_cast %269 : vector<1x1x256xf32> to vector<1x256xf32>
    %271 = vector.shape_cast %268 : vector<1x256xf32> to vector<1x1x256xf32>
    tpu.vector_store %arg9[%c0_59, %c0_60, %c0_61], %271 {strides = array<i32>} : memref<1x1x256xf32, #tpu.memory_space<vmem>>, vector<1x1x256xf32>,
    return
  }
  func.func @transform_0(%arg0: i32) -> (i32, i32, i32) {
    %c0_i32 = arith.constant 0 : i32
    %c0_i32_0 = arith.constant 0 : i32
    %c0_i32_1 = arith.constant 0 : i32
    return %arg0, %c0_i32, %c0_i32_0 : i32, i32, i32
  }
  func.func @transform_1(%arg0: i32) -> (i32, i32, i32) {
    %c0_i32 = arith.constant 0 : i32
    %c0_i32_0 = arith.constant 0 : i32
    %c0_i32_1 = arith.constant 0 : i32
    %c0_i32_2 = arith.constant 0 : i32
    return %c0_i32, %c0_i32_0, %c0_i32_1 : i32, i32, i32
  }
  func.func @transform_2(%arg0: i32) -> (i32, i32) {
    %c0_i32 = arith.constant 0 : i32
    %c0_i32_0 = arith.constant 0 : i32
    %c0_i32_1 = arith.constant 0 : i32
    return %c0_i32, %c0_i32_0 : i32, i32
  }
  func.func @transform_3(%arg0: i32) -> (i32, i32) {
    %c0_i32 = arith.constant 0 : i32
    %c0_i32_0 = arith.constant 0 : i32
    %c0_i32_1 = arith.constant 0 : i32
    return %c0_i32, %c0_i32_0 : i32, i32
  }
  func.func @transform_4(%arg0: i32) -> (i32, i32, i32) {
    %c0_i32 = arith.constant 0 : i32
    %c0_i32_0 = arith.constant 0 : i32
    %c0_i32_1 = arith.constant 0 : i32
    %c0_i32_2 = arith.constant 0 : i32
    return %c0_i32, %c0_i32_0, %c0_i32_1 : i32, i32, i32
  }
  func.func @transform_5(%arg0: i32) -> (i32, i32, i32) {
    %c0_i32 = arith.constant 0 : i32
    %c0_i32_0 = arith.constant 0 : i32
    %c0_i32_1 = arith.constant 0 : i32
    %c0_i32_2 = arith.constant 0 : i32
    return %c0_i32, %c0_i32_0, %c0_i32_1 : i32, i32, i32
  }
  func.func @transform_6(%arg0: i32) -> (i32, i32) {
    %c0_i32 = arith.constant 0 : i32
    %c0_i32_0 = arith.constant 0 : i32
    %c0_i32_1 = arith.constant 0 : i32
    return %c0_i32, %c0_i32_0 : i32, i32
  }
  func.func @transform_7(%arg0: i32) -> (i32, i32) {
    %c0_i32 = arith.constant 0 : i32
    %c0_i32_0 = arith.constant 0 : i32
    %c0_i32_1 = arith.constant 0 : i32
    return %c0_i32, %c0_i32_0 : i32, i32
  }
  func.func @transform_8(%arg0: i32) -> (i32, i32, i32) {
    %c0_i32 = arith.constant 0 : i32
    %c0_i32_0 = arith.constant 0 : i32
    %c0_i32_1 = arith.constant 0 : i32
    return %arg0, %c0_i32, %c0_i32_0 : i32, i32, i32
  }
}

</mosaic_0001>

<llo_original>
// kernel: edsr_forward.1
$region0: #{edsr_forward.1}
  #allocation0 [shape = 'u32[]', space=smem, size = 0x4, offset = 0x4, fixed_abs, tag = 'smem constant byte address 0x4 - core index']
  #allocation1 [shape = 'u32[144,128]{1,0:T(1,128)}', space=vmem, size = 0x12000, scoped, tag = 'internal scratch']
  #allocation2 [shape = 'f32[1,1]{1,0:T(1,128)S(1)}', space=vmem, size = 0x200, scoped, tag = 'scoped memory for edsr_forward.1']
  %s0 = inlined_call_operand.vmem [shape: f32[2,1,256], index: 0, kind: input, shape index: {}]
  %s1 = inlined_call_operand.vmem [shape: f32[2,1,256], index: 1, kind: input, shape index: {}]
  %s2 = inlined_call_operand.vmem [shape: f32[8,9], index: 2, kind: input, shape index: {}]
  %s3 = inlined_call_operand.vmem [shape: f32[8,1], index: 3, kind: input, shape index: {}]
  %s4 = inlined_call_operand.vmem [shape: bf16[5,8,72], index: 4, kind: input, shape index: {}]
  %s5 = inlined_call_operand.vmem [shape: f32[5,8,1], index: 5, kind: input, shape index: {}]
  %s6 = inlined_call_operand.vmem [shape: f32[72,1], index: 6, kind: input, shape index: {}]
  %s7 = inlined_call_operand.<no memory space> [shape: f32[1,1], index: 7, kind: input, shape index: {}]
  %s8 = inlined_call_operand.vmem [shape: f32[2,1,256], index: 8, kind: output, shape index: {}]
  %s9 = sld [smem:[#allocation0]]
  $region65: #{edsr_forward.1} parent=0
    _
  %s11 = ssub.s32 1, %s9
  %s12 = scalar_select 0, %s11, %s9
  %v13 = vstv %s7
  %14 = vst [vmem:[#allocation2] sm:$0x1] %v13
  loop: start=0, step=1, limit=4
  $region2: #{edsr_forward.1} parent=0 // loop_pre_header
    _
  $region3: #{edsr_forward.1} parent=0 // loop_header
    %s16 = sphi 0, %s20
    %p17 = scmp.ge.s32.totalorder %s16, 4
    %s26 = sphi 0, %s28
    %s29 = sphi 0, %s26
    %s30 = sphi 0, %s29
    %s46 = sphi 0, %s30
    %s50 = sphi 0, %s50
    %s52 = sphi 0, %s50
    %s53 = sphi 0, %s52
    %s67 = sphi 0, %s53
    %s71 = sphi 0, %s71
    %s73 = sphi 0, %s71
    %s74 = sphi 0, %s73
    %s88 = sphi 0, %s74
    %s92 = sphi 0, %s92
    %s94 = sphi 0, %s92
    %s95 = sphi 0, %s94
    %s109 = sphi 0, %s95
    %s113 = sphi 0, %s113
    %s115 = sphi 0, %s113
    %s116 = sphi 0, %s115
    %s130 = sphi 0, %s116
    %s134 = sphi 0, %s134
    %s136 = sphi 0, %s134
    %s137 = sphi 0, %s136
    %s151 = sphi 0, %s137
    %s155 = sphi 0, %s155
    %s157 = sphi 0, %s155
    %s158 = sphi 0, %s157
    %s172 = sphi 0, %s158
    %s176 = sphi 0, %s176
    %s178 = sphi 0, %s176
    %s179 = sphi 0, %s178
    %s193 = sphi 0, %s179
    %s199 = sphi 0, %s201
    %s202 = sphi 0, %s199
    %s203 = sphi 0, %s202
    %s219 = sphi 0, %s203
  $region4: #{edsr_forward.1} parent=0 // loop_header_branch
    %19 = sbr.rel (%p17) target = $region8
  $region5: #{edsr_forward.1} parent=0 // loop_body
    %s21 = ssub.s32 %s16, 1
    %s22 = ssub.s32 %s16, 2
    %s23 = sadd.s32 %s16, 1
    %s24 = ssub.s32 %s16, %s23
    %p25 = scmp.eq.s32.totalorder %s24, 0
    %s27 = sadd.s32 %s26, 1
    %s28 = scalar_select %p25, %s26, %s27
    %p31 = pneg %p25
    %p32 = scmp.eq.s32.totalorder %s16, 1
    %p33 = por %p31, %p32
    %p34 = scmp.ne.s32.totalorder %s26, %s29
    %p35 = scmp.eq.s32.totalorder %s16, 0
    %p36 = por %p34, %p35
    %p37 = scmp.ne.s32.totalorder %s26, %s29
    %p38 = scmp.eq.s32.totalorder %s21, 1
    %p39 = por %p37, %p38
    %p40 = scmp.ne.s32.totalorder %s29, %s30
    %p41 = scmp.eq.s32.totalorder %s21, 0
    %p42 = por %p40, %p41
    %p43 = scmp.ne.s32.totalorder %s29, %s30
    %p44 = scmp.eq.s32.totalorder %s22, 1
    %p45 = por %p43, %p44
    %p47 = scmp.ne.s32.totalorder %s30, %s46
    %p48 = scmp.eq.s32.totalorder %s22, 0
    %p49 = por %p47, %p48
    %s51 = sadd.s32 %s50, 1
    %p54 = scmp.eq.s32.totalorder %s16, 1
    %p55 = scmp.ne.s32.totalorder %s50, %s52
    %p56 = scmp.eq.s32.totalorder %s16, 0
    %p57 = por %p55, %p56
    %p58 = scmp.ne.s32.totalorder %s50, %s52
    %p59 = scmp.eq.s32.totalorder %s21, 1
    %p60 = por %p58, %p59
    %p61 = scmp.ne.s32.totalorder %s52, %s53
    %p62 = scmp.eq.s32.totalorder %s21, 0
    %p63 = por %p61, %p62
    %p64 = scmp.ne.s32.totalorder %s52, %s53
    %p65 = scmp.eq.s32.totalorder %s22, 1
    %p66 = por %p64, %p65
    %p68 = scmp.ne.s32.totalorder %s53, %s67
    %p69 = scmp.eq.s32.totalorder %s22, 0
    %p70 = por %p68, %p69
    %s72 = sadd.s32 %s71, 1
    %p75 = scmp.eq.s32.totalorder %s16, 1
    %p76 = scmp.ne.s32.totalorder %s71, %s73
    %p77 = scmp.eq.s32.totalorder %s16, 0
    %p78 = por %p76, %p77
    %p79 = scmp.ne.s32.totalorder %s71, %s73
    %p80 = scmp.eq.s32.totalorder %s21, 1
    %p81 = por %p79, %p80
    %p82 = scmp.ne.s32.totalorder %s73, %s74
    %p83 = scmp.eq.s32.totalorder %s21, 0
    %p84 = por %p82, %p83
    %p85 = scmp.ne.s32.totalorder %s73, %s74
    %p86 = scmp.eq.s32.totalorder %s22, 1
    %p87 = por %p85, %p86
    %p89 = scmp.ne.s32.totalorder %s74, %s88
    %p90 = scmp.eq.s32.totalorder %s22, 0
    %p91 = por %p89, %p90
    %s93 = sadd.s32 %s92, 1
    %p96 = scmp.eq.s32.totalorder %s16, 1
    %p97 = scmp.ne.s32.totalorder %s92, %s94
    %p98 = scmp.eq.s32.totalorder %s16, 0
    %p99 = por %p97, %p98
    %p100 = scmp.ne.s32.totalorder %s92, %s94
    %p101 = scmp.eq.s32.totalorder %s21, 1
    %p102 = por %p100, %p101
    %p103 = scmp.ne.s32.totalorder %s94, %s95
    %p104 = scmp.eq.s32.totalorder %s21, 0
    %p105 = por %p103, %p104
    %p106 = scmp.ne.s32.totalorder %s94, %s95
    %p107 = scmp.eq.s32.totalorder %s22, 1
    %p108 = por %p106, %p107
    %p110 = scmp.ne.s32.totalorder %s95, %s109
    %p111 = scmp.eq.s32.totalorder %s22, 0
    %p112 = por %p110, %p111
    %s114 = sadd.s32 %s113, 1
    %p117 = scmp.eq.s32.totalorder %s16, 1
    %p118 = scmp.ne.s32.totalorder %s113, %s115
    %p119 = scmp.eq.s32.totalorder %s16, 0
    %p120 = por %p118, %p119
    %p121 = scmp.ne.s32.totalorder %s113, %s115
    %p122 = scmp.eq.s32.totalorder %s21, 1
    %p123 = por %p121, %p122
    %p124 = scmp.ne.s32.totalorder %s115, %s116
    %p125 = scmp.eq.s32.totalorder %s21, 0
    %p126 = por %p124, %p125
    %p127 = scmp.ne.s32.totalorder %s115, %s116
    %p128 = scmp.eq.s32.totalorder %s22, 1
    %p129 = por %p127, %p128
    %p131 = scmp.ne.s32.totalorder %s116, %s130
    %p132 = scmp.eq.s32.totalorder %s22, 0
    %p133 = por %p131, %p132
    %s135 = sadd.s32 %s134, 1
    %p138 = scmp.eq.s32.totalorder %s16, 1
    %p139 = scmp.ne.s32.totalorder %s134, %s136
    %p140 = scmp.eq.s32.totalorder %s16, 0
    %p141 = por %p139, %p140
    %p142 = scmp.ne.s32.totalorder %s134, %s136
    %p143 = scmp.eq.s32.totalorder %s21, 1
    %p144 = por %p142, %p143
    %p145 = scmp.ne.s32.totalorder %s136, %s137
    %p146 = scmp.eq.s32.totalorder %s21, 0
    %p147 = por %p145, %p146
    %p148 = scmp.ne.s32.totalorder %s136, %s137
    %p149 = scmp.eq.s32.totalorder %s22, 1
    %p150 = por %p148, %p149
    %p152 = scmp.ne.s32.totalorder %s137, %s151
    %p153 = scmp.eq.s32.totalorder %s22, 0
    %p154 = por %p152, %p153
    %s156 = sadd.s32 %s155, 1
    %p159 = scmp.eq.s32.totalorder %s16, 1
    %p160 = scmp.ne.s32.totalorder %s155, %s157
    %p161 = scmp.eq.s32.totalorder %s16, 0
    %p162 = por %p160, %p161
    %p163 = scmp.ne.s32.totalorder %s155, %s157
    %p164 = scmp.eq.s32.totalorder %s21, 1
    %p165 = por %p163, %p164
    %p166 = scmp.ne.s32.totalorder %s157, %s158
    %p167 = scmp.eq.s32.totalorder %s21, 0
    %p168 = por %p166, %p167
    %p169 = scmp.ne.s32.totalorder %s157, %s158
    %p170 = scmp.eq.s32.totalorder %s22, 1
    %p171 = por %p169, %p170
    %p173 = scmp.ne.s32.totalorder %s158, %s172
    %p174 = scmp.eq.s32.totalorder %s22, 0
    %p175 = por %p173, %p174
    %s177 = sadd.s32 %s176, 1
    %p180 = scmp.eq.s32.totalorder %s16, 1
    %p181 = scmp.ne.s32.totalorder %s176, %s178
    %p182 = scmp.eq.s32.totalorder %s16, 0
    %p183 = por %p181, %p182
    %p184 = scmp.ne.s32.totalorder %s176, %s178
    %p185 = scmp.eq.s32.totalorder %s21, 1
    %p186 = por %p184, %p185
    %p187 = scmp.ne.s32.totalorder %s178, %s179
    %p188 = scmp.eq.s32.totalorder %s21, 0
    %p189 = por %p187, %p188
    %p190 = scmp.ne.s32.totalorder %s178, %s179
    %p191 = scmp.eq.s32.totalorder %s22, 1
    %p192 = por %p190, %p191
    %p194 = scmp.ne.s32.totalorder %s179, %s193
    %p195 = scmp.eq.s32.totalorder %s22, 0
    %p196 = por %p194, %p195
    %s197 = ssub.s32 %s16, %s23
    %p198 = scmp.eq.s32.totalorder %s197, 0
    %s200 = sadd.s32 %s199, 1
    %s201 = scalar_select %p198, %s199, %s200
    %p204 = pneg %p198
    %p205 = scmp.eq.s32.totalorder %s16, 1
    %p206 = por %p204, %p205
    %p207 = scmp.ne.s32.totalorder %s199, %s202
    %p208 = scmp.eq.s32.totalorder %s16, 0
    %p209 = por %p207, %p208
    %p210 = scmp.ne.s32.totalorder %s199, %s202
    %p211 = scmp.eq.s32.totalorder %s21, 1
    %p212 = por %p210, %p211
    %p213 = scmp.ne.s32.totalorder %s202, %s203
    %p214 = scmp.eq.s32.totalorder %s21, 0
    %p215 = por %p213, %p214
    %p216 = scmp.ne.s32.totalorder %s202, %s203
    %p217 = scmp.eq.s32.totalorder %s22, 1
    %p218 = por %p216, %p217
    %p220 = scmp.ne.s32.totalorder %s203, %s219
    %p221 = scmp.eq.s32.totalorder %s22, 0
    %p222 = por %p220, %p221
    %p223 = scmp.le.s32.totalorder 1, %s16
    %p224 = scmp.lt.s32.totalorder %s16, 3
    %p225 = pnand %p223, %p224
    %p226 = pneg %p225
    // Predicated region
    $region9: #{edsr_forward.1} parent=5 // pred_check
      _
    $region10: #{edsr_forward.1} parent=5 // pred_check_branch
      %228 = sbr.rel (%p225) target = $region12
    $region11: #{edsr_forward.1} parent=5 // pred_region
      %s229 = ssub.s32 %s16, 1
      // Predicated region
      $region13: #{edsr_forward.1} parent=11 // pred_check
        %p230 = pneg %p63
      $region14: #{edsr_forward.1} parent=11 // pred_check_branch
        %232 = sbr.rel (%p230) target = $region16
      $region15: #{edsr_forward.1} parent=11 // pred_region
        _
      $region16: #{edsr_forward.1} parent=11 // pred_fallthru
        _
      // Predicated region
      $region17: #{edsr_forward.1} parent=11 // pred_check
        %p233 = pneg %p84
      $region18: #{edsr_forward.1} parent=11 // pred_check_branch
        %235 = sbr.rel (%p233) target = $region20
      $region19: #{edsr_forward.1} parent=11 // pred_region
        _
      $region20: #{edsr_forward.1} parent=11 // pred_fallthru
        _
      // Predicated region
      $region21: #{edsr_forward.1} parent=11 // pred_check
        %p236 = pneg %p105
      $region22: #{edsr_forward.1} parent=11 // pred_check_branch
        %238 = sbr.rel (%p236) target = $region24
      $region23: #{edsr_forward.1} parent=11 // pred_region
        _
      $region24: #{edsr_forward.1} parent=11 // pred_fallthru
        _
      // Predicated region
      $region25: #{edsr_forward.1} parent=11 // pred_check
        %p239 = pneg %p126
      $region26: #{edsr_forward.1} parent=11 // pred_check_branch
        %241 = sbr.rel (%p239) target = $region28
      $region27: #{edsr_forward.1} parent=11 // pred_region
        _
      $region28: #{edsr_forward.1} parent=11 // pred_fallthru
        _
      // Predicated region
      $region29: #{edsr_forward.1} parent=11 // pred_check
        %p242 = pneg %p147
      $region30: #{edsr_forward.1} parent=11 // pred_check_branch
        %244 = sbr.rel (%p242) target = $region32
      $region31: #{edsr_forward.1} parent=11 // pred_region
        _
      $region32: #{edsr_forward.1} parent=11 // pred_fallthru
        _
      // Predicated region
      $region33: #{edsr_forward.1} parent=11 // pred_check
        %p245 = pneg %p168
      $region34: #{edsr_forward.1} parent=11 // pred_check_branch
        %247 = sbr.rel (%p245) target = $region36
      $region35: #{edsr_forward.1} parent=11 // pred_region
        _
      $region36: #{edsr_forward.1} parent=11 // pred_fallthru
        _
      // Predicated region
      $region37: #{edsr_forward.1} parent=11 // pred_check
        %p248 = pneg %p189
      $region38: #{edsr_forward.1} parent=11 // pred_check_branch
        %250 = sbr.rel (%p248) target = $region40
      $region39: #{edsr_forward.1} parent=11 // pred_region
        _
      $region40: #{edsr_forward.1} parent=11 // pred_fallthru
        _
    $region12: #{edsr_forward.1} parent=5 // pred_fallthru
      _
    %p251 = scmp.lt.s32.totalorder %s16, 2
    // Predicated region
    $region41: #{edsr_forward.1} parent=5 // pred_check
      %p252 = pneg %p251
    $region42: #{edsr_forward.1} parent=5 // pred_check_branch
      %254 = sbr.rel (%p252) target = $region44
    $region43: #{edsr_forward.1} parent=5 // pred_region
      // Predicated region
      $region45: #{edsr_forward.1} parent=43 // pred_check
        %p255 = pneg %p36
      $region46: #{edsr_forward.1} parent=43 // pred_check_branch
        %257 = sbr.rel (%p255) target = $region48
      $region47: #{edsr_forward.1} parent=43 // pred_region
        %p258 = scmp.lt.s32.totalorder %s16, 1
        %s259 = scalar_select %p258, %s16, 1
        %s260 = smul.addr %s259, 2
        %s261 = scalar_lea.vmem %s0, %s260
      $region48: #{edsr_forward.1} parent=43 // pred_fallthru
        _
    $region44: #{edsr_forward.1} parent=5 // pred_fallthru
      _
    %p262 = scmp.le.s32.totalorder 1, %s16
    %p263 = scmp.lt.s32.totalorder %s16, 3
    %p264 = pnand %p262, %p263
    %p265 = pneg %p264
    // Predicated region
    $region49: #{edsr_forward.1} parent=5 // pred_check
      _
    $region50: #{edsr_forward.1} parent=5 // pred_check_branch
      %267 = sbr.rel (%p264) target = $region52
    $region51: #{edsr_forward.1} parent=5 // pred_region
      %s268 = ssub.s32 %s16, 1
      %p269 = scmp.lt.s32.totalorder %s21, 1
      %s270 = scalar_select %p269, %s21, 1
      %s271 = smul.addr %s270, 2
      %s272 = scalar_lea.vmem %s0, %s271
      %p273 = pneg %p42
      %p274 = pneg %p39
      %p275 = pneg %p63
      %p276 = pneg %p60
      %p277 = pneg %p84
      %p278 = pneg %p81
      %p279 = pneg %p105
      %p280 = pneg %p102
      %p281 = pneg %p126
      %p282 = pneg %p123
      %p283 = pneg %p147
      %p284 = pneg %p144
      %p285 = pneg %p168
      %p286 = pneg %p165
      %p287 = pneg %p189
      %p288 = pneg %p186
      %p289 = pneg %p215
      %p290 = pneg %p212
      %p291 = scmp.lt.s32.totalorder %s21, 1
      %s292 = scalar_select %p291, %s21, 1
      %s293 = smul.addr %s292, 2
      %s294 = scalar_lea.vmem %s8, %s293
      %p295 = scmp.lt.s32.totalorder %s21, 1
      %s296 = scalar_select %p295, %s21, 1
      %s297 = smul.addr %s296, 2
      %s298 = scalar_lea.vmem %s0, %s297
      %p299 = scmp.lt.s32.totalorder %s21, 1
      %s300 = scalar_select %p299, %s21, 1
      %s301 = smul.addr %s300, 2
      %s302 = scalar_lea.vmem %s8, %s301
      %v304 = vld [vmem:[%s1] sm:$0x3]
      %s305 = scalar_lea.vmem %s1, 2
      %v306 = vld [vmem:[%s305] sm:$0x3]
      %v307 = vld [vmem:[%s298] sm:$0x3]
      %v308 = vld [vmem:[%s2] sm:$0xff]
      %v309 = vld [vmem:[%s3] sm:$0xff]
      %v311 = vlaneseq
      %v312 = vshrl.u32 %v311, 7
      %v313 = vsub.s32 0, %v312
      %v314 = vrot.slane %v307, %v313
      %v315 = vlaneseq
      %v316 = vshrl.u32 %v315, 7
      %v317 = vsub.s32 1, %v316
      %v318 = vrot.slane %v307, %v317
      %319 = vrot.lane.b32.xlu0 %v314, 17
      %v320 = vpop.permute.xlu0 %319
      %321 = vrot.lane.b32.xlu0 %v318, 17
      %v322 = vpop.permute.xlu0 %321
      %vm323 = vcmask 138240
      %v324 = vsel %vm323, %v320, %v322
      %v328 = vsel %vm323, 0.0, %v320
      %v329 = vsel %vm323, %v322, 0.0
      %v331 = vlaneseq
      %v332 = vshrl.u32 %v331, 7
      %v333 = vsub.s32 0, %v332
      %v334 = vrot.slane %v304, %v333
      %v335 = vlaneseq
      %v336 = vshrl.u32 %v335, 7
      %v337 = vsub.s32 1, %v336
      %v338 = vrot.slane %v304, %v337
      %v341 = vmul.f32 %v328, %v334
      %v342 = vmul.f32 %v324, %v338
      %v344 = vlaneseq
      %v345 = vshrl.u32 %v344, 7
      %v346 = vsub.s32 0, %v345
      %v347 = vrot.slane %v306, %v346
      %v348 = vlaneseq
      %v349 = vshrl.u32 %v348, 7
      %v350 = vsub.s32 1, %v349
      %v351 = vrot.slane %v306, %v350
      %352 = vrot.lane.b32.xlu0 %v347, 2
      %v353 = vpop.permute.xlu0 %352
      %354 = vrot.lane.b32.xlu0 %v351, 2
      %v355 = vpop.permute.xlu0 %354
      %vm356 = vcmask 15360
      %v357 = vsel %vm356, %v353, %v355
      %v361 = vmul.f32 %v328, %v353
      %v362 = vmul.f32 %v324, %v357
      %v363 = vmul.f32 %v329, %v355
      %364 = vrot.lane.b32.xlu0 %v334, 16
      %v365 = vpop.permute.xlu0 %364
      %366 = vrot.lane.b32.xlu0 %v338, 16
      %v367 = vpop.permute.xlu0 %366
      %vm368 = vcmask 130048
      %v369 = vsel %vm368, %v365, %v367
      %v373 = vmul.f32 %v328, %v365
      %v374 = vmul.f32 %v324, %v369
      %v375 = vmul.f32 %v329, %v367
      %376 = vrot.lane.b32.xlu0 %v347, 18
      %v377 = vpop.permute.xlu0 %376
      %378 = vrot.lane.b32.xlu0 %v351, 18
      %v379 = vpop.permute.xlu0 %378
      %vm380 = vcmask 146432
      %v381 = vsel %vm380, %v377, %v379
      %v385 = vmul.f32 %v328, %v377
      %v386 = vmul.f32 %v324, %v381
      %v387 = vmul.f32 %v329, %v379
      %388 = vrot.lane.b32.xlu0 %v334, 32
      %v389 = vpop.permute.xlu0 %388
      %390 = vrot.lane.b32.xlu0 %v338, 32
      %v391 = vpop.permute.xlu0 %390
      %vm392 = vcmask 261120
      %v393 = vsel %vm392, %v389, %v391
      %v397 = vmul.f32 %v328, %v389
      %v398 = vmul.f32 %v324, %v393
      %v399 = vmul.f32 %v329, %v391
      %400 = vrot.lane.b32.xlu0 %v347, 34
      %v401 = vpop.permute.xlu0 %400
      %402 = vrot.lane.b32.xlu0 %v351, 34
      %v403 = vpop.permute.xlu0 %402
      %vm404 = vcmask 277504
      %v405 = vsel %vm404, %v401, %v403
      %v409 = vmul.f32 %v328, %v401
      %v410 = vmul.f32 %v324, %v405
      %v411 = vmul.f32 %v329, %v403
      %413 = vset.pattern.permute.xlu0 0
      %414 = vperm.xlu0 %413, %v308
      %v415 = vpop.permute.xlu0 %414
      %v417 = vlaneseq
      %v418 = vshrl.u32 %v417, 7
      %v419 = vsub.s32 0, %v418
      %v420 = vrot.slane %v341, %v419
      %v421 = vlaneseq
      %v422 = vshrl.u32 %v421, 7
      %v423 = vsub.s32 0, %v422
      %v424 = vrot.slane %v342, %v423
      %v425 = vmul.f32 %v415, %v420
      %v426 = vmul.f32 %v415, %v424
      %v427 = vadd.f32 %v425, 0.0
      %v428 = vadd.f32 %v426, 0.0
      %429 = vset.pattern.permute.xlu0 1
      %430 = vperm.xlu0 %429, %v308
      %v431 = vpop.permute.xlu0 %430
      %v433 = vlaneseq
      %v434 = vshrl.u32 %v433, 7
      %v435 = vsub.s32 0, %v434
      %v436 = vrot.slane %v328, %v435
      %v437 = vlaneseq
      %v438 = vshrl.u32 %v437, 7
      %v439 = vsub.s32 0, %v438
      %v440 = vrot.slane %v324, %v439
      %v441 = vlaneseq
      %v442 = vshrl.u32 %v441, 7
      %v443 = vsub.s32 0, %v442
      %v444 = vrot.slane %v329, %v443
      %v445 = vmul.f32 %v431, %v436
      %v446 = vmul.f32 %v431, %v440
      %v447 = vmul.f32 %v431, %v444
      %451 = vrot.lane.b32.xlu0 %v445, 127
      %v452 = vpop.permute.xlu0 %451
      %453 = vrot.lane.b32.xlu0 %v446, 127
      %v454 = vpop.permute.xlu0 %453
      %455 = vrot.lane.b32.xlu0 %v447, 127
      %v456 = vpop.permute.xlu0 %455
      %vm457 = vcmask 1039360
      %v458 = vsel %vm457, %v452, %v454
      %v459 = vsel %vm457, %v454, %v456
      %v462 = vadd.f32 %v427, %v458
      %v463 = vadd.f32 %v428, %v459
      %464 = vset.pattern.permute.xlu0 2
      %465 = vperm.xlu0 %464, %v308
      %v466 = vpop.permute.xlu0 %465
      %v468 = vlaneseq
      %v469 = vshrl.u32 %v468, 7
      %v470 = vsub.s32 0, %v469
      %v471 = vrot.slane %v361, %v470
      %v472 = vlaneseq
      %v473 = vshrl.u32 %v472, 7
      %v474 = vsub.s32 0, %v473
      %v475 = vrot.slane %v362, %v474
      %v476 = vlaneseq
      %v477 = vshrl.u32 %v476, 7
      %v478 = vsub.s32 0, %v477
      %v479 = vrot.slane %v363, %v478
      %v480 = vmul.f32 %v466, %v471
      %v481 = vmul.f32 %v466, %v475
      %v482 = vmul.f32 %v466, %v479
      %486 = vrot.lane.b32.xlu0 %v480, 126
      %v487 = vpop.permute.xlu0 %486
      %488 = vrot.lane.b32.xlu0 %v481, 126
      %v489 = vpop.permute.xlu0 %488
      %490 = vrot.lane.b32.xlu0 %v482, 126
      %v491 = vpop.permute.xlu0 %490
      %vm492 = vcmask 1031168
      %v493 = vsel %vm492, %v487, %v489
      %v494 = vsel %vm492, %v489, %v491
      %v497 = vadd.f32 %v462, %v493
      %v498 = vadd.f32 %v463, %v494
      %499 = vset.pattern.permute.xlu0 3
      %500 = vperm.xlu0 %499, %v308
      %v501 = vpop.permute.xlu0 %500
      %v503 = vlaneseq
      %v504 = vshrl.u32 %v503, 7
      %v505 = vsub.s32 0, %v504
      %v506 = vrot.slane %v373, %v505
      %v507 = vlaneseq
      %v508 = vshrl.u32 %v507, 7
      %v509 = vsub.s32 0, %v508
      %v510 = vrot.slane %v374, %v509
      %v511 = vlaneseq
      %v512 = vshrl.u32 %v511, 7
      %v513 = vsub.s32 0, %v512
      %v514 = vrot.slane %v375, %v513
      %v515 = vmul.f32 %v501, %v506
      %v516 = vmul.f32 %v501, %v510
      %v517 = vmul.f32 %v501, %v514
      %521 = vrot.lane.b32.xlu0 %v515, 112
      %v522 = vpop.permute.xlu0 %521
      %523 = vrot.lane.b32.xlu0 %v516, 112
      %v524 = vpop.permute.xlu0 %523
      %525 = vrot.lane.b32.xlu0 %v517, 112
      %v526 = vpop.permute.xlu0 %525
      %vm527 = vcmask 916480
      %v528 = vsel %vm527, %v522, %v524
      %v529 = vsel %vm527, %v524, %v526
      %v532 = vadd.f32 %v497, %v528
      %v533 = vadd.f32 %v498, %v529
      %534 = vset.pattern.permute.xlu0 4
      %535 = vperm.xlu0 %534, %v308
      %v536 = vpop.permute.xlu0 %535
      %v540 = vmul.f32 %v536, %v314
      %v541 = vmul.f32 %v536, %v318
      %v542 = vadd.f32 %v532, %v540
      %v543 = vadd.f32 %v533, %v541
      %544 = vset.pattern.permute.xlu0 5
      %545 = vperm.xlu0 %544, %v308
      %v546 = vpop.permute.xlu0 %545
      %v548 = vlaneseq
      %v549 = vshrl.u32 %v548, 7
      %v550 = vsub.s32 0, %v549
      %v551 = vrot.slane %v385, %v550
      %v552 = vlaneseq
      %v553 = vshrl.u32 %v552, 7
      %v554 = vsub.s32 0, %v553
      %v555 = vrot.slane %v386, %v554
      %v556 = vlaneseq
      %v557 = vshrl.u32 %v556, 7
      %v558 = vsub.s32 0, %v557
      %v559 = vrot.slane %v387, %v558
      %v560 = vmul.f32 %v546, %v551
      %v561 = vmul.f32 %v546, %v555
      %v562 = vmul.f32 %v546, %v559
      %566 = vrot.lane.b32.xlu0 %v560, 110
      %v567 = vpop.permute.xlu0 %566
      %568 = vrot.lane.b32.xlu0 %v561, 110
      %v569 = vpop.permute.xlu0 %568
      %570 = vrot.lane.b32.xlu0 %v562, 110
      %v571 = vpop.permute.xlu0 %570
      %vm572 = vcmask 900096
      %v573 = vsel %vm572, %v567, %v569
      %v574 = vsel %vm572, %v569, %v571
      %v577 = vadd.f32 %v542, %v573
      %v578 = vadd.f32 %v543, %v574
      %579 = vset.pattern.permute.xlu0 6
      %580 = vperm.xlu0 %579, %v308
      %v581 = vpop.permute.xlu0 %580
      %v583 = vlaneseq
      %v584 = vshrl.u32 %v583, 7
      %v585 = vsub.s32 0, %v584
      %v586 = vrot.slane %v397, %v585
      %v587 = vlaneseq
      %v588 = vshrl.u32 %v587, 7
      %v589 = vsub.s32 0, %v588
      %v590 = vrot.slane %v398, %v589
      %v591 = vlaneseq
      %v592 = vshrl.u32 %v591, 7
      %v593 = vsub.s32 0, %v592
      %v594 = vrot.slane %v399, %v593
      %v595 = vmul.f32 %v581, %v586
      %v596 = vmul.f32 %v581, %v590
      %v597 = vmul.f32 %v581, %v594
      %601 = vrot.lane.b32.xlu0 %v595, 96
      %v602 = vpop.permute.xlu0 %601
      %603 = vrot.lane.b32.xlu0 %v596, 96
      %v604 = vpop.permute.xlu0 %603
      %605 = vrot.lane.b32.xlu0 %v597, 96
      %v606 = vpop.permute.xlu0 %605
      %vm607 = vcmask 785408
      %v608 = vsel %vm607, %v602, %v604
      %v609 = vsel %vm607, %v604, %v606
      %v612 = vadd.f32 %v577, %v608
      %v613 = vadd.f32 %v578, %v609
      %614 = vset.pattern.permute.xlu0 7
      %615 = vperm.xlu0 %614, %v308
      %v616 = vpop.permute.xlu0 %615
      %v618 = vmul.f32 %v616, %v436
      %v619 = vmul.f32 %v616, %v440
      %v620 = vmul.f32 %v616, %v444
      %624 = vrot.lane.b32.xlu0 %v618, 95
      %v625 = vpop.permute.xlu0 %624
      %626 = vrot.lane.b32.xlu0 %v619, 95
      %v627 = vpop.permute.xlu0 %626
      %628 = vrot.lane.b32.xlu0 %v620, 95
      %v629 = vpop.permute.xlu0 %628
      %vm630 = vcmask 777216
      %v631 = vsel %vm630, %v625, %v627
      %v632 = vsel %vm630, %v627, %v629
      %v635 = vadd.f32 %v612, %v631
      %v636 = vadd.f32 %v613, %v632
      %637 = vset.pattern.permute.xlu0 8
      %638 = vperm.xlu0 %637, %v308
      %v639 = vpop.permute.xlu0 %638
      %v641 = vlaneseq
      %v642 = vshrl.u32 %v641, 7
      %v643 = vsub.s32 0, %v642
      %v644 = vrot.slane %v409, %v643
      %v645 = vlaneseq
      %v646 = vshrl.u32 %v645, 7
      %v647 = vsub.s32 0, %v646
      %v648 = vrot.slane %v410, %v647
      %v649 = vlaneseq
      %v650 = vshrl.u32 %v649, 7
      %v651 = vsub.s32 0, %v650
      %v652 = vrot.slane %v411, %v651
      %v653 = vmul.f32 %v639, %v644
      %v654 = vmul.f32 %v639, %v648
      %v655 = vmul.f32 %v639, %v652
      %659 = vrot.lane.b32.xlu0 %v653, 94
      %v660 = vpop.permute.xlu0 %659
      %661 = vrot.lane.b32.xlu0 %v654, 94
      %v662 = vpop.permute.xlu0 %661
      %663 = vrot.lane.b32.xlu0 %v655, 94
      %v664 = vpop.permute.xlu0 %663
      %vm665 = vcmask 769024
      %v666 = vsel %vm665, %v660, %v662
      %v667 = vsel %vm665, %v662, %v664
      %v670 = vadd.f32 %v635, %v666
      %v671 = vadd.f32 %v636, %v667
      %673 = vset.pattern.permute.xlu0 0
      %674 = vperm.xlu0 %673, %v309
      %v675 = vpop.permute.xlu0 %674
      %v677 = vadd.f32 %v670, %v675
      %v678 = vadd.f32 %v671, %v675
      %v679 = vld [vmem:[%s4] sm:$0xf]
      %v680 = vld [vmem:[%s5] sm:$0xff]
      %683 = vrot.lane.b32.xlu0 %v677, 17
      %v684 = vpop.permute.xlu0 %683
      %685 = vrot.lane.b32.xlu0 %v678, 17
      %v686 = vpop.permute.xlu0 %685
      %v687 = vsel %vm323, %v684, %v686
      %v691 = vsel %vm323, 0.0, %v684
      %v692 = vsel %vm323, %v686, 0.0
      %v693 = vmul.f32 %v691, %v334
      %v694 = vmul.f32 %v687, %v338
      %v695 = vmul.f32 %v691, %v353
      %v696 = vmul.f32 %v687, %v357
      %v697 = vmul.f32 %v692, %v355
      %v698 = vmul.f32 %v691, %v365
      %v699 = vmul.f32 %v687, %v369
      %v700 = vmul.f32 %v692, %v367
      %v701 = vmul.f32 %v691, %v377
      %v702 = vmul.f32 %v687, %v381
      %v703 = vmul.f32 %v692, %v379
      %v704 = vmul.f32 %v691, %v389
      %v705 = vmul.f32 %v687, %v393
      %v706 = vmul.f32 %v692, %v391
      %v707 = vmul.f32 %v691, %v401
      %v708 = vmul.f32 %v687, %v405
      %v709 = vmul.f32 %v692, %v403
      %712 = vrot.lane.b32.xlu0 %v691, 127
      %v713 = vpop.permute.xlu0 %712
      %714 = vrot.lane.b32.xlu0 %v687, 127
      %v715 = vpop.permute.xlu0 %714
      %716 = vrot.lane.b32.xlu0 %v692, 127
      %v717 = vpop.permute.xlu0 %716
      %v718 = vsel %vm457, %v713, %v715
      %v719 = vsel %vm457, %v715, %v717
      %725 = vrot.lane.b32.xlu0 %v695, 126
      %v726 = vpop.permute.xlu0 %725
      %727 = vrot.lane.b32.xlu0 %v696, 126
      %v728 = vpop.permute.xlu0 %727
      %729 = vrot.lane.b32.xlu0 %v697, 126
      %v730 = vpop.permute.xlu0 %729
      %v731 = vsel %vm492, %v726, %v728
      %v732 = vsel %vm492, %v728, %v730
      %738 = vrot.lane.b32.xlu0 %v698, 112
      %v739 = vpop.permute.xlu0 %738
      %740 = vrot.lane.b32.xlu0 %v699, 112
      %v741 = vpop.permute.xlu0 %740
      %742 = vrot.lane.b32.xlu0 %v700, 112
      %v743 = vpop.permute.xlu0 %742
      %v744 = vsel %vm527, %v739, %v741
      %v745 = vsel %vm527, %v741, %v743
      %751 = vrot.lane.b32.xlu0 %v701, 110
      %v752 = vpop.permute.xlu0 %751
      %753 = vrot.lane.b32.xlu0 %v702, 110
      %v754 = vpop.permute.xlu0 %753
      %755 = vrot.lane.b32.xlu0 %v703, 110
      %v756 = vpop.permute.xlu0 %755
      %v757 = vsel %vm572, %v752, %v754
      %v758 = vsel %vm572, %v754, %v756
      %764 = vrot.lane.b32.xlu0 %v704, 96
      %v765 = vpop.permute.xlu0 %764
      %766 = vrot.lane.b32.xlu0 %v705, 96
      %v767 = vpop.permute.xlu0 %766
      %768 = vrot.lane.b32.xlu0 %v706, 96
      %v769 = vpop.permute.xlu0 %768
      %v770 = vsel %vm607, %v765, %v767
      %v771 = vsel %vm607, %v767, %v769
      %774 = vrot.lane.b32.xlu0 %v691, 95
      %v775 = vpop.permute.xlu0 %774
      %776 = vrot.lane.b32.xlu0 %v687, 95
      %v777 = vpop.permute.xlu0 %776
      %778 = vrot.lane.b32.xlu0 %v692, 95
      %v779 = vpop.permute.xlu0 %778
      %v780 = vsel %vm630, %v775, %v777
      %v781 = vsel %vm630, %v777, %v779
      %787 = vrot.lane.b32.xlu0 %v707, 94
      %v788 = vpop.permute.xlu0 %787
      %789 = vrot.lane.b32.xlu0 %v708, 94
      %v790 = vpop.permute.xlu0 %789
      %791 = vrot.lane.b32.xlu0 %v709, 94
      %v792 = vpop.permute.xlu0 %791
      %v793 = vsel %vm665, %v788, %v790
      %v794 = vsel %vm665, %v790, %v792
      %v797 = vpack.c.bf16 %v718, %v693
      %v798 = vpack.c.bf16 %v719, %v694
      %v799 = vpack.c.bf16 %v744, %v731
      %v800 = vpack.c.bf16 %v745, %v732
      %v801 = vpack.c.bf16 %v757, %v677
      %v802 = vpack.c.bf16 %v758, %v678
      %v803 = vpack.c.bf16 %v780, %v770
      %v804 = vpack.c.bf16 %v781, %v771
      %v805 = vpack.c.bf16 %v793, %v793
      %v806 = vpack.c.bf16 %v794, %v794
      %808 = vset.pattern.permute.xlu0 0
      %809 = vperm.xlu0 %808, %v680
      %v810 = vpop.permute.xlu0 %809
      %vm812 = vcmask 588800
      %v814 = vsel %vm812, %v679, 0
      %vm816 = vcmask 1043456
      %v818 = vsel %vm816, %v805, 0
      %v821 = vsel %vm816, %v806, 0
      %823 = vmatprep.subr.bf16.mxu0 0
      %824 = vmatpush1.bf16.msra.mxu0 0
      %825 = vmatprep.subr.bf16.mxu0 0
      %826 = vmatpush1.bf16.msra.mxu0 0
      %827 = vmatprep.subr.bf16.mxu0 0
      %828 = vmatpush1.bf16.msra.mxu0 0
      %829 = vmatprep.subr.bf16.mxu0 %v821
      %830 = vmatpush1.bf16.msra.mxu0 %v818
      %831 = vmatprep.subr.bf16.mxu0 %v804
      %832 = vmatpush1.bf16.msra.mxu0 %v803
      %833 = vmatprep.subr.bf16.mxu0 %v802
      %834 = vmatpush1.bf16.msra.mxu0 %v801
      %835 = vmatprep.subr.bf16.mxu0 %v800
      %836 = vmatpush1.bf16.msra.mxu0 %v799
      %837 = vmatprep.subr.bf16.mxu0 %v798
      %838 = vmatpush1.bf16.msra.mxu0 %v797
      %839 = vmatprep.subr.bf16.mxu0 0
      %840 = vmatpush2.bf16.msra.mxu0 0
      %841 = vmatprep.subr.bf16.mxu0 0
      %842 = vmatpush2.bf16.msra.mxu0 0
      %843 = vmatprep.subr.bf16.mxu0 0
      %844 = vmatpush2.bf16.msra.mxu0 0
      %845 = vmatprep.subr.bf16.mxu0 0
      %846 = vmatpush2.bf16.msra.mxu0 0
      %847 = vmatprep.subr.bf16.mxu0 0
      %848 = vmatpush2.bf16.msra.mxu0 0
      %849 = vmatprep.subr.bf16.mxu0 0
      %850 = vmatpush2.bf16.msra.mxu0 0
      %851 = vmatprep.subr.bf16.mxu0 0
      %852 = vmatpush2.bf16.msra.mxu0 0
      %853 = vmatprep.subr.bf16.mxu0 0
      %854 = vmatpush2.bf16.msra.mxu0 0
      %855 = vmatprep.mubr.bf16.mxu0 0
      %856 = vmatmul.mubr.bf16.gmra.mxu0 %v814
      %v857 = vpop.f32.mrf.mxu0
      %v858 = vadd.f32 %v810, %v857
      %v859 = vpop.f32.mrf.mxu0
      %v860 = vadd.f32 %v810, %v859
      %v861 = vpop.f32.mrf.mxu0
      %v862 = vpop.f32.mrf.mxu0
      %863 = vdwg.mxu0
      %v864 = vmax.f32 %v858, 0.0
      %v865 = vmax.f32 %v860, 0.0
      %s866 = scalar_lea.vmem %s4, 4
      %v867 = vld [vmem:[%s866] sm:$0xf]
      %s868 = scalar_lea.vmem %s5, 8
      %v869 = vld [vmem:[%s868] sm:$0xff]
      %872 = vrot.lane.b32.xlu0 %v864, 17
      %v873 = vpop.permute.xlu0 %872
      %874 = vrot.lane.b32.xlu0 %v865, 17
      %v875 = vpop.permute.xlu0 %874
      %v876 = vsel %vm323, %v873, %v875
      %v880 = vsel %vm323, 0.0, %v873
      %v881 = vsel %vm323, %v875, 0.0
      %v882 = vmul.f32 %v880, %v334
      %v883 = vmul.f32 %v876, %v338
      %v884 = vmul.f32 %v880, %v353
      %v885 = vmul.f32 %v876, %v357
      %v886 = vmul.f32 %v881, %v355
      %v887 = vmul.f32 %v880, %v365
      %v888 = vmul.f32 %v876, %v369
      %v889 = vmul.f32 %v881, %v367
      %v890 = vmul.f32 %v880, %v377
      %v891 = vmul.f32 %v876, %v381
      %v892 = vmul.f32 %v881, %v379
      %v893 = vmul.f32 %v880, %v389
      %v894 = vmul.f32 %v876, %v393
      %v895 = vmul.f32 %v881, %v391
      %v896 = vmul.f32 %v880, %v401
      %v897 = vmul.f32 %v876, %v405
      %v898 = vmul.f32 %v881, %v403
      %901 = vrot.lane.b32.xlu0 %v880, 127
      %v902 = vpop.permute.xlu0 %901
      %903 = vrot.lane.b32.xlu0 %v876, 127
      %v904 = vpop.permute.xlu0 %903
      %905 = vrot.lane.b32.xlu0 %v881, 127
      %v906 = vpop.permute.xlu0 %905
      %v907 = vsel %vm457, %v902, %v904
      %v908 = vsel %vm457, %v904, %v906
      %914 = vrot.lane.b32.xlu0 %v884, 126
      %v915 = vpop.permute.xlu0 %914
      %916 = vrot.lane.b32.xlu0 %v885, 126
      %v917 = vpop.permute.xlu0 %916
      %918 = vrot.lane.b32.xlu0 %v886, 126
      %v919 = vpop.permute.xlu0 %918
      %v920 = vsel %vm492, %v915, %v917
      %v921 = vsel %vm492, %v917, %v919
      %927 = vrot.lane.b32.xlu0 %v887, 112
      %v928 = vpop.permute.xlu0 %927
      %929 = vrot.lane.b32.xlu0 %v888, 112
      %v930 = vpop.permute.xlu0 %929
      %931 = vrot.lane.b32.xlu0 %v889, 112
      %v932 = vpop.permute.xlu0 %931
      %v933 = vsel %vm527, %v928, %v930
      %v934 = vsel %vm527, %v930, %v932
      %940 = vrot.lane.b32.xlu0 %v890, 110
      %v941 = vpop.permute.xlu0 %940
      %942 = vrot.lane.b32.xlu0 %v891, 110
      %v943 = vpop.permute.xlu0 %942
      %944 = vrot.lane.b32.xlu0 %v892, 110
      %v945 = vpop.permute.xlu0 %944
      %v946 = vsel %vm572, %v941, %v943
      %v947 = vsel %vm572, %v943, %v945
      %953 = vrot.lane.b32.xlu0 %v893, 96
      %v954 = vpop.permute.xlu0 %953
      %955 = vrot.lane.b32.xlu0 %v894, 96
      %v956 = vpop.permute.xlu0 %955
      %957 = vrot.lane.b32.xlu0 %v895, 96
      %v958 = vpop.permute.xlu0 %957
      %v959 = vsel %vm607, %v954, %v956
      %v960 = vsel %vm607, %v956, %v958
      %963 = vrot.lane.b32.xlu0 %v880, 95
      %v964 = vpop.permute.xlu0 %963
      %965 = vrot.lane.b32.xlu0 %v876, 95
      %v966 = vpop.permute.xlu0 %965
      %967 = vrot.lane.b32.xlu0 %v881, 95
      %v968 = vpop.permute.xlu0 %967
      %v969 = vsel %vm630, %v964, %v966
      %v970 = vsel %vm630, %v966, %v968
      %976 = vrot.lane.b32.xlu0 %v896, 94
      %v977 = vpop.permute.xlu0 %976
      %978 = vrot.lane.b32.xlu0 %v897, 94
      %v979 = vpop.permute.xlu0 %978
      %980 = vrot.lane.b32.xlu0 %v898, 94
      %v981 = vpop.permute.xlu0 %980
      %v982 = vsel %vm665, %v977, %v979
      %v983 = vsel %vm665, %v979, %v981
      %v986 = vpack.c.bf16 %v907, %v882
      %v987 = vpack.c.bf16 %v908, %v883
      %v988 = vpack.c.bf16 %v933, %v920
      %v989 = vpack.c.bf16 %v934, %v921
      %v990 = vpack.c.bf16 %v946, %v864
      %v991 = vpack.c.bf16 %v947, %v865
      %v992 = vpack.c.bf16 %v969, %v959
      %v993 = vpack.c.bf16 %v970, %v960
      %v994 = vpack.c.bf16 %v982, %v982
      %v995 = vpack.c.bf16 %v983, %v983
      %997 = vset.pattern.permute.xlu0 0
      %998 = vperm.xlu0 %997, %v869
      %v999 = vpop.permute.xlu0 %998
      %v1002 = vsel %vm812, %v867, 0
      %v1005 = vsel %vm816, %v994, 0
      %v1008 = vsel %vm816, %v995, 0
      %1010 = vmatprep.subr.bf16.mxu0 0
      %1011 = vmatpush1.bf16.msra.mxu0 0
      %1012 = vmatprep.subr.bf16.mxu0 0
      %1013 = vmatpush1.bf16.msra.mxu0 0
      %1014 = vmatprep.subr.bf16.mxu0 0
      %1015 = vmatpush1.bf16.msra.mxu0 0
      %1016 = vmatprep.subr.bf16.mxu0 %v1008
      %1017 = vmatpush1.bf16.msra.mxu0 %v1005
      %1018 = vmatprep.subr.bf16.mxu0 %v993
      %1019 = vmatpush1.bf16.msra.mxu0 %v992
      %1020 = vmatprep.subr.bf16.mxu0 %v991
      %1021 = vmatpush1.bf16.msra.mxu0 %v990
      %1022 = vmatprep.subr.bf16.mxu0 %v989
      %1023 = vmatpush1.bf16.msra.mxu0 %v988
      %1024 = vmatprep.subr.bf16.mxu0 %v987
      %1025 = vmatpush1.bf16.msra.mxu0 %v986
      %1026 = vmatprep.subr.bf16.mxu0 0
      %1027 = vmatpush2.bf16.msra.mxu0 0
      %1028 = vmatprep.subr.bf16.mxu0 0
      %1029 = vmatpush2.bf16.msra.mxu0 0
      %1030 = vmatprep.subr.bf16.mxu0 0
      %1031 = vmatpush2.bf16.msra.mxu0 0
      %1032 = vmatprep.subr.bf16.mxu0 0
      %1033 = vmatpush2.bf16.msra.mxu0 0
      %1034 = vmatprep.subr.bf16.mxu0 0
      %1035 = vmatpush2.bf16.msra.mxu0 0
      %1036 = vmatprep.subr.bf16.mxu0 0
      %1037 = vmatpush2.bf16.msra.mxu0 0
      %1038 = vmatprep.subr.bf16.mxu0 0
      %1039 = vmatpush2.bf16.msra.mxu0 0
      %1040 = vmatprep.subr.bf16.mxu0 0
      %1041 = vmatpush2.bf16.msra.mxu0 0
      %1042 = vmatprep.mubr.bf16.mxu0 0
      %1043 = vmatmul.mubr.bf16.gmra.mxu0 %v1002
      %v1044 = vpop.f32.mrf.mxu0
      %v1045 = vadd.f32 %v999, %v1044
      %v1046 = vpop.f32.mrf.mxu0
      %v1047 = vadd.f32 %v999, %v1046
      %v1048 = vpop.f32.mrf.mxu0
      %v1049 = vpop.f32.mrf.mxu0
      %1050 = vdwg.mxu0
      %v1051 = vmul.f32 %v1045, 0.1
      %v1052 = vmul.f32 %v1047, 0.1
      %v1053 = vadd.f32 %v1051, %v677
      %v1054 = vadd.f32 %v1052, %v678
      %s1055 = scalar_lea.vmem %s4, 8
      %v1056 = vld [vmem:[%s1055] sm:$0xf]
      %s1057 = scalar_lea.vmem %s5, 16
      %v1058 = vld [vmem:[%s1057] sm:$0xff]
      %1061 = vrot.lane.b32.xlu0 %v1053, 17
      %v1062 = vpop.permute.xlu0 %1061
      %1063 = vrot.lane.b32.xlu0 %v1054, 17
      %v1064 = vpop.permute.xlu0 %1063
      %v1065 = vsel %vm323, %v1062, %v1064
      %v1069 = vsel %vm323, 0.0, %v1062
      %v1070 = vsel %vm323, %v1064, 0.0
      %v1071 = vmul.f32 %v1069, %v334
      %v1072 = vmul.f32 %v1065, %v338
      %v1073 = vmul.f32 %v1069, %v353
      %v1074 = vmul.f32 %v1065, %v357
      %v1075 = vmul.f32 %v1070, %v355
      %v1076 = vmul.f32 %v1069, %v365
      %v1077 = vmul.f32 %v1065, %v369
      %v1078 = vmul.f32 %v1070, %v367
      %v1079 = vmul.f32 %v1069, %v377
      %v1080 = vmul.f32 %v1065, %v381
      %v1081 = vmul.f32 %v1070, %v379
      %v1082 = vmul.f32 %v1069, %v389
      %v1083 = vmul.f32 %v1065, %v393
      %v1084 = vmul.f32 %v1070, %v391
      %v1085 = vmul.f32 %v1069, %v401
      %v1086 = vmul.f32 %v1065, %v405
      %v1087 = vmul.f32 %v1070, %v403
      %1090 = vrot.lane.b32.xlu0 %v1069, 127
      %v1091 = vpop.permute.xlu0 %1090
      %1092 = vrot.lane.b32.xlu0 %v1065, 127
      %v1093 = vpop.permute.xlu0 %1092
      %1094 = vrot.lane.b32.xlu0 %v1070, 127
      %v1095 = vpop.permute.xlu0 %1094
      %v1096 = vsel %vm457, %v1091, %v1093
      %v1097 = vsel %vm457, %v1093, %v1095
      %1103 = vrot.lane.b32.xlu0 %v1073, 126
      %v1104 = vpop.permute.xlu0 %1103
      %1105 = vrot.lane.b32.xlu0 %v1074, 126
      %v1106 = vpop.permute.xlu0 %1105
      %1107 = vrot.lane.b32.xlu0 %v1075, 126
      %v1108 = vpop.permute.xlu0 %1107
      %v1109 = vsel %vm492, %v1104, %v1106
      %v1110 = vsel %vm492, %v1106, %v1108
      %1116 = vrot.lane.b32.xlu0 %v1076, 112
      %v1117 = vpop.permute.xlu0 %1116
      %1118 = vrot.lane.b32.xlu0 %v1077, 112
      %v1119 = vpop.permute.xlu0 %1118
      %1120 = vrot.lane.b32.xlu0 %v1078, 112
      %v1121 = vpop.permute.xlu0 %1120
      %v1122 = vsel %vm527, %v1117, %v1119
      %v1123 = vsel %vm527, %v1119, %v1121
      %1129 = vrot.lane.b32.xlu0 %v1079, 110
      %v1130 = vpop.permute.xlu0 %1129
      %1131 = vrot.lane.b32.xlu0 %v1080, 110
      %v1132 = vpop.permute.xlu0 %1131
      %1133 = vrot.lane.b32.xlu0 %v1081, 110
      %v1134 = vpop.permute.xlu0 %1133
      %v1135 = vsel %vm572, %v1130, %v1132
      %v1136 = vsel %vm572, %v1132, %v1134
      %1142 = vrot.lane.b32.xlu0 %v1082, 96
      %v1143 = vpop.permute.xlu0 %1142
      %1144 = vrot.lane.b32.xlu0 %v1083, 96
      %v1145 = vpop.permute.xlu0 %1144
      %1146 = vrot.lane.b32.xlu0 %v1084, 96
      %v1147 = vpop.permute.xlu0 %1146
      %v1148 = vsel %vm607, %v1143, %v1145
      %v1149 = vsel %vm607, %v1145, %v1147
      %1152 = vrot.lane.b32.xlu0 %v1069, 95
      %v1153 = vpop.permute.xlu0 %1152
      %1154 = vrot.lane.b32.xlu0 %v1065, 95
      %v1155 = vpop.permute.xlu0 %1154
      %1156 = vrot.lane.b32.xlu0 %v1070, 95
      %v1157 = vpop.permute.xlu0 %1156
      %v1158 = vsel %vm630, %v1153, %v1155
      %v1159 = vsel %vm630, %v1155, %v1157
      %1165 = vrot.lane.b32.xlu0 %v1085, 94
      %v1166 = vpop.permute.xlu0 %1165
      %1167 = vrot.lane.b32.xlu0 %v1086, 94
      %v1168 = vpop.permute.xlu0 %1167
      %1169 = vrot.lane.b32.xlu0 %v1087, 94
      %v1170 = vpop.permute.xlu0 %1169
      %v1171 = vsel %vm665, %v1166, %v1168
      %v1172 = vsel %vm665, %v1168, %v1170
      %v1175 = vpack.c.bf16 %v1096, %v1071
      %v1176 = vpack.c.bf16 %v1097, %v1072
      %v1177 = vpack.c.bf16 %v1122, %v1109
      %v1178 = vpack.c.bf16 %v1123, %v1110
      %v1179 = vpack.c.bf16 %v1135, %v1053
      %v1180 = vpack.c.bf16 %v1136, %v1054
      %v1181 = vpack.c.bf16 %v1158, %v1148
      %v1182 = vpack.c.bf16 %v1159, %v1149
      %v1183 = vpack.c.bf16 %v1171, %v1171
      %v1184 = vpack.c.bf16 %v1172, %v1172
      %1186 = vset.pattern.permute.xlu0 0
      %1187 = vperm.xlu0 %1186, %v1058
      %v1188 = vpop.permute.xlu0 %1187
      %v1191 = vsel %vm812, %v1056, 0
      %v1194 = vsel %vm816, %v1183, 0
      %v1197 = vsel %vm816, %v1184, 0
      %1199 = vmatprep.subr.bf16.mxu0 0
      %1200 = vmatpush1.bf16.msra.mxu0 0
      %1201 = vmatprep.subr.bf16.mxu0 0
      %1202 = vmatpush1.bf16.msra.mxu0 0
      %1203 = vmatprep.subr.bf16.mxu0 0
      %1204 = vmatpush1.bf16.msra.mxu0 0
      %1205 = vmatprep.subr.bf16.mxu0 %v1197
      %1206 = vmatpush1.bf16.msra.mxu0 %v1194
      %1207 = vmatprep.subr.bf16.mxu0 %v1182
      %1208 = vmatpush1.bf16.msra.mxu0 %v1181
      %1209 = vmatprep.subr.bf16.mxu0 %v1180
      %1210 = vmatpush1.bf16.msra.mxu0 %v1179
      %1211 = vmatprep.subr.bf16.mxu0 %v1178
      %1212 = vmatpush1.bf16.msra.mxu0 %v1177
      %1213 = vmatprep.subr.bf16.mxu0 %v1176
      %1214 = vmatpush1.bf16.msra.mxu0 %v1175
      %1215 = vmatprep.subr.bf16.mxu0 0
      %1216 = vmatpush2.bf16.msra.mxu0 0
      %1217 = vmatprep.subr.bf16.mxu0 0
      %1218 = vmatpush2.bf16.msra.mxu0 0
      %1219 = vmatprep.subr.bf16.mxu0 0
      %1220 = vmatpush2.bf16.msra.mxu0 0
      %1221 = vmatprep.subr.bf16.mxu0 0
      %1222 = vmatpush2.bf16.msra.mxu0 0
      %1223 = vmatprep.subr.bf16.mxu0 0
      %1224 = vmatpush2.bf16.msra.mxu0 0
      %1225 = vmatprep.subr.bf16.mxu0 0
      %1226 = vmatpush2.bf16.msra.mxu0 0
      %1227 = vmatprep.subr.bf16.mxu0 0
      %1228 = vmatpush2.bf16.msra.mxu0 0
      %1229 = vmatprep.subr.bf16.mxu0 0
      %1230 = vmatpush2.bf16.msra.mxu0 0
      %1231 = vmatprep.mubr.bf16.mxu0 0
      %1232 = vmatmul.mubr.bf16.gmra.mxu0 %v1191
      %v1233 = vpop.f32.mrf.mxu0
      %v1234 = vadd.f32 %v1188, %v1233
      %v1235 = vpop.f32.mrf.mxu0
      %v1236 = vadd.f32 %v1188, %v1235
      %v1237 = vpop.f32.mrf.mxu0
      %v1238 = vpop.f32.mrf.mxu0
      %1239 = vdwg.mxu0
      %v1240 = vmax.f32 %v1234, 0.0
      %v1241 = vmax.f32 %v1236, 0.0
      %s1242 = scalar_lea.vmem %s4, 12
      %v1243 = vld [vmem:[%s1242] sm:$0xf]
      %s1244 = scalar_lea.vmem %s5, 24
      %v1245 = vld [vmem:[%s1244] sm:$0xff]
      %1248 = vrot.lane.b32.xlu0 %v1240, 17
      %v1249 = vpop.permute.xlu0 %1248
      %1250 = vrot.lane.b32.xlu0 %v1241, 17
      %v1251 = vpop.permute.xlu0 %1250
      %v1252 = vsel %vm323, %v1249, %v1251
      %v1256 = vsel %vm323, 0.0, %v1249
      %v1257 = vsel %vm323, %v1251, 0.0
      %v1258 = vmul.f32 %v1256, %v334
      %v1259 = vmul.f32 %v1252, %v338
      %v1260 = vmul.f32 %v1256, %v353
      %v1261 = vmul.f32 %v1252, %v357
      %v1262 = vmul.f32 %v1257, %v355
      %v1263 = vmul.f32 %v1256, %v365
      %v1264 = vmul.f32 %v1252, %v369
      %v1265 = vmul.f32 %v1257, %v367
      %v1266 = vmul.f32 %v1256, %v377
      %v1267 = vmul.f32 %v1252, %v381
      %v1268 = vmul.f32 %v1257, %v379
      %v1269 = vmul.f32 %v1256, %v389
      %v1270 = vmul.f32 %v1252, %v393
      %v1271 = vmul.f32 %v1257, %v391
      %v1272 = vmul.f32 %v1256, %v401
      %v1273 = vmul.f32 %v1252, %v405
      %v1274 = vmul.f32 %v1257, %v403
      %1277 = vrot.lane.b32.xlu0 %v1256, 127
      %v1278 = vpop.permute.xlu0 %1277
      %1279 = vrot.lane.b32.xlu0 %v1252, 127
      %v1280 = vpop.permute.xlu0 %1279
      %1281 = vrot.lane.b32.xlu0 %v1257, 127
      %v1282 = vpop.permute.xlu0 %1281
      %v1283 = vsel %vm457, %v1278, %v1280
      %v1284 = vsel %vm457, %v1280, %v1282
      %1290 = vrot.lane.b32.xlu0 %v1260, 126
      %v1291 = vpop.permute.xlu0 %1290
      %1292 = vrot.lane.b32.xlu0 %v1261, 126
      %v1293 = vpop.permute.xlu0 %1292
      %1294 = vrot.lane.b32.xlu0 %v1262, 126
      %v1295 = vpop.permute.xlu0 %1294
      %v1296 = vsel %vm492, %v1291, %v1293
      %v1297 = vsel %vm492, %v1293, %v1295
      %1303 = vrot.lane.b32.xlu0 %v1263, 112
      %v1304 = vpop.permute.xlu0 %1303
      %1305 = vrot.lane.b32.xlu0 %v1264, 112
      %v1306 = vpop.permute.xlu0 %1305
      %1307 = vrot.lane.b32.xlu0 %v1265, 112
      %v1308 = vpop.permute.xlu0 %1307
      %v1309 = vsel %vm527, %v1304, %v1306
      %v1310 = vsel %vm527, %v1306, %v1308
      %1316 = vrot.lane.b32.xlu0 %v1266, 110
      %v1317 = vpop.permute.xlu0 %1316
      %1318 = vrot.lane.b32.xlu0 %v1267, 110
      %v1319 = vpop.permute.xlu0 %1318
      %1320 = vrot.lane.b32.xlu0 %v1268, 110
      %v1321 = vpop.permute.xlu0 %1320
      %v1322 = vsel %vm572, %v1317, %v1319
      %v1323 = vsel %vm572, %v1319, %v1321
      %1329 = vrot.lane.b32.xlu0 %v1269, 96
      %v1330 = vpop.permute.xlu0 %1329
      %1331 = vrot.lane.b32.xlu0 %v1270, 96
      %v1332 = vpop.permute.xlu0 %1331
      %1333 = vrot.lane.b32.xlu0 %v1271, 96
      %v1334 = vpop.permute.xlu0 %1333
      %v1335 = vsel %vm607, %v1330, %v1332
      %v1336 = vsel %vm607, %v1332, %v1334
      %1339 = vrot.lane.b32.xlu0 %v1256, 95
      %v1340 = vpop.permute.xlu0 %1339
      %1341 = vrot.lane.b32.xlu0 %v1252, 95
      %v1342 = vpop.permute.xlu0 %1341
      %1343 = vrot.lane.b32.xlu0 %v1257, 95
      %v1344 = vpop.permute.xlu0 %1343
      %v1345 = vsel %vm630, %v1340, %v1342
      %v1346 = vsel %vm630, %v1342, %v1344
      %1352 = vrot.lane.b32.xlu0 %v1272, 94
      %v1353 = vpop.permute.xlu0 %1352
      %1354 = vrot.lane.b32.xlu0 %v1273, 94
      %v1355 = vpop.permute.xlu0 %1354
      %1356 = vrot.lane.b32.xlu0 %v1274, 94
      %v1357 = vpop.permute.xlu0 %1356
      %v1358 = vsel %vm665, %v1353, %v1355
      %v1359 = vsel %vm665, %v1355, %v1357
      %v1362 = vpack.c.bf16 %v1283, %v1258
      %v1363 = vpack.c.bf16 %v1284, %v1259
      %v1364 = vpack.c.bf16 %v1309, %v1296
      %v1365 = vpack.c.bf16 %v1310, %v1297
      %v1366 = vpack.c.bf16 %v1322, %v1240
      %v1367 = vpack.c.bf16 %v1323, %v1241
      %v1368 = vpack.c.bf16 %v1345, %v1335
      %v1369 = vpack.c.bf16 %v1346, %v1336
      %v1370 = vpack.c.bf16 %v1358, %v1358
      %v1371 = vpack.c.bf16 %v1359, %v1359
      %1373 = vset.pattern.permute.xlu0 0
      %1374 = vperm.xlu0 %1373, %v1245
      %v1375 = vpop.permute.xlu0 %1374
      %v1378 = vsel %vm812, %v1243, 0
      %v1381 = vsel %vm816, %v1370, 0
      %v1384 = vsel %vm816, %v1371, 0
      %1386 = vmatprep.subr.bf16.mxu0 0
      %1387 = vmatpush1.bf16.msra.mxu0 0
      %1388 = vmatprep.subr.bf16.mxu0 0
      %1389 = vmatpush1.bf16.msra.mxu0 0
      %1390 = vmatprep.subr.bf16.mxu0 0
      %1391 = vmatpush1.bf16.msra.mxu0 0
      %1392 = vmatprep.subr.bf16.mxu0 %v1384
      %1393 = vmatpush1.bf16.msra.mxu0 %v1381
      %1394 = vmatprep.subr.bf16.mxu0 %v1369
      %1395 = vmatpush1.bf16.msra.mxu0 %v1368
      %1396 = vmatprep.subr.bf16.mxu0 %v1367
      %1397 = vmatpush1.bf16.msra.mxu0 %v1366
      %1398 = vmatprep.subr.bf16.mxu0 %v1365
      %1399 = vmatpush1.bf16.msra.mxu0 %v1364
      %1400 = vmatprep.subr.bf16.mxu0 %v1363
      %1401 = vmatpush1.bf16.msra.mxu0 %v1362
      %1402 = vmatprep.subr.bf16.mxu0 0
      %1403 = vmatpush2.bf16.msra.mxu0 0
      %1404 = vmatprep.subr.bf16.mxu0 0
      %1405 = vmatpush2.bf16.msra.mxu0 0
      %1406 = vmatprep.subr.bf16.mxu0 0
      %1407 = vmatpush2.bf16.msra.mxu0 0
      %1408 = vmatprep.subr.bf16.mxu0 0
      %1409 = vmatpush2.bf16.msra.mxu0 0
      %1410 = vmatprep.subr.bf16.mxu0 0
      %1411 = vmatpush2.bf16.msra.mxu0 0
      %1412 = vmatprep.subr.bf16.mxu0 0
      %1413 = vmatpush2.bf16.msra.mxu0 0
      %1414 = vmatprep.subr.bf16.mxu0 0
      %1415 = vmatpush2.bf16.msra.mxu0 0
      %1416 = vmatprep.subr.bf16.mxu0 0
      %1417 = vmatpush2.bf16.msra.mxu0 0
      %1418 = vmatprep.mubr.bf16.mxu0 0
      %1419 = vmatmul.mubr.bf16.gmra.mxu0 %v1378
      %v1420 = vpop.f32.mrf.mxu0
      %v1421 = vadd.f32 %v1375, %v1420
      %v1422 = vpop.f32.mrf.mxu0
      %v1423 = vadd.f32 %v1375, %v1422
      %v1424 = vpop.f32.mrf.mxu0
      %v1425 = vpop.f32.mrf.mxu0
      %1426 = vdwg.mxu0
      %v1427 = vmul.f32 %v1421, 0.1
      %v1428 = vmul.f32 %v1423, 0.1
      %v1429 = vadd.f32 %v1427, %v1053
      %v1430 = vadd.f32 %v1428, %v1054
      %s1431 = scalar_lea.vmem %s4, 16
      %v1432 = vld [vmem:[%s1431] sm:$0xf]
      %s1433 = scalar_lea.vmem %s5, 32
      %v1434 = vld [vmem:[%s1433] sm:$0xff]
      %1437 = vrot.lane.b32.xlu0 %v1429, 17
      %v1438 = vpop.permute.xlu0 %1437
      %1439 = vrot.lane.b32.xlu0 %v1430, 17
      %v1440 = vpop.permute.xlu0 %1439
      %v1441 = vsel %vm323, %v1438, %v1440
      %v1445 = vsel %vm323, 0.0, %v1438
      %v1446 = vsel %vm323, %v1440, 0.0
      %v1447 = vmul.f32 %v1445, %v334
      %v1448 = vmul.f32 %v1441, %v338
      %v1449 = vmul.f32 %v1445, %v353
      %v1450 = vmul.f32 %v1441, %v357
      %v1451 = vmul.f32 %v1446, %v355
      %v1452 = vmul.f32 %v1445, %v365
      %v1453 = vmul.f32 %v1441, %v369
      %v1454 = vmul.f32 %v1446, %v367
      %v1455 = vmul.f32 %v1445, %v377
      %v1456 = vmul.f32 %v1441, %v381
      %v1457 = vmul.f32 %v1446, %v379
      %v1458 = vmul.f32 %v1445, %v389
      %v1459 = vmul.f32 %v1441, %v393
      %v1460 = vmul.f32 %v1446, %v391
      %v1461 = vmul.f32 %v1445, %v401
      %v1462 = vmul.f32 %v1441, %v405
      %v1463 = vmul.f32 %v1446, %v403
      %1466 = vrot.lane.b32.xlu0 %v1445, 127
      %v1467 = vpop.permute.xlu0 %1466
      %1468 = vrot.lane.b32.xlu0 %v1441, 127
      %v1469 = vpop.permute.xlu0 %1468
      %1470 = vrot.lane.b32.xlu0 %v1446, 127
      %v1471 = vpop.permute.xlu0 %1470
      %v1472 = vsel %vm457, %v1467, %v1469
      %v1473 = vsel %vm457, %v1469, %v1471
      %1479 = vrot.lane.b32.xlu0 %v1449, 126
      %v1480 = vpop.permute.xlu0 %1479
      %1481 = vrot.lane.b32.xlu0 %v1450, 126
      %v1482 = vpop.permute.xlu0 %1481
      %1483 = vrot.lane.b32.xlu0 %v1451, 126
      %v1484 = vpop.permute.xlu0 %1483
      %v1485 = vsel %vm492, %v1480, %v1482
      %v1486 = vsel %vm492, %v1482, %v1484
      %1492 = vrot.lane.b32.xlu0 %v1452, 112
      %v1493 = vpop.permute.xlu0 %1492
      %1494 = vrot.lane.b32.xlu0 %v1453, 112
      %v1495 = vpop.permute.xlu0 %1494
      %1496 = vrot.lane.b32.xlu0 %v1454, 112
      %v1497 = vpop.permute.xlu0 %1496
      %v1498 = vsel %vm527, %v1493, %v1495
      %v1499 = vsel %vm527, %v1495, %v1497
      %1505 = vrot.lane.b32.xlu0 %v1455, 110
      %v1506 = vpop.permute.xlu0 %1505
      %1507 = vrot.lane.b32.xlu0 %v1456, 110
      %v1508 = vpop.permute.xlu0 %1507
      %1509 = vrot.lane.b32.xlu0 %v1457, 110
      %v1510 = vpop.permute.xlu0 %1509
      %v1511 = vsel %vm572, %v1506, %v1508
      %v1512 = vsel %vm572, %v1508, %v1510
      %1518 = vrot.lane.b32.xlu0 %v1458, 96
      %v1519 = vpop.permute.xlu0 %1518
      %1520 = vrot.lane.b32.xlu0 %v1459, 96
      %v1521 = vpop.permute.xlu0 %1520
      %1522 = vrot.lane.b32.xlu0 %v1460, 96
      %v1523 = vpop.permute.xlu0 %1522
      %v1524 = vsel %vm607, %v1519, %v1521
      %v1525 = vsel %vm607, %v1521, %v1523
      %1528 = vrot.lane.b32.xlu0 %v1445, 95
      %v1529 = vpop.permute.xlu0 %1528
      %1530 = vrot.lane.b32.xlu0 %v1441, 95
      %v1531 = vpop.permute.xlu0 %1530
      %1532 = vrot.lane.b32.xlu0 %v1446, 95
      %v1533 = vpop.permute.xlu0 %1532
      %v1534 = vsel %vm630, %v1529, %v1531
      %v1535 = vsel %vm630, %v1531, %v1533
      %1541 = vrot.lane.b32.xlu0 %v1461, 94
      %v1542 = vpop.permute.xlu0 %1541
      %1543 = vrot.lane.b32.xlu0 %v1462, 94
      %v1544 = vpop.permute.xlu0 %1543
      %1545 = vrot.lane.b32.xlu0 %v1463, 94
      %v1546 = vpop.permute.xlu0 %1545
      %v1547 = vsel %vm665, %v1542, %v1544
      %v1548 = vsel %vm665, %v1544, %v1546
      %v1551 = vpack.c.bf16 %v1472, %v1447
      %v1552 = vpack.c.bf16 %v1473, %v1448
      %v1553 = vpack.c.bf16 %v1498, %v1485
      %v1554 = vpack.c.bf16 %v1499, %v1486
      %v1555 = vpack.c.bf16 %v1511, %v1429
      %v1556 = vpack.c.bf16 %v1512, %v1430
      %v1557 = vpack.c.bf16 %v1534, %v1524
      %v1558 = vpack.c.bf16 %v1535, %v1525
      %v1559 = vpack.c.bf16 %v1547, %v1547
      %v1560 = vpack.c.bf16 %v1548, %v1548
      %1562 = vset.pattern.permute.xlu0 0
      %1563 = vperm.xlu0 %1562, %v1434
      %v1564 = vpop.permute.xlu0 %1563
      %v1567 = vsel %vm812, %v1432, 0
      %v1570 = vsel %vm816, %v1559, 0
      %v1573 = vsel %vm816, %v1560, 0
      %1575 = vmatprep.subr.bf16.mxu0 0
      %1576 = vmatpush1.bf16.msra.mxu0 0
      %1577 = vmatprep.subr.bf16.mxu0 0
      %1578 = vmatpush1.bf16.msra.mxu0 0
      %1579 = vmatprep.subr.bf16.mxu0 0
      %1580 = vmatpush1.bf16.msra.mxu0 0
      %1581 = vmatprep.subr.bf16.mxu0 %v1573
      %1582 = vmatpush1.bf16.msra.mxu0 %v1570
      %1583 = vmatprep.subr.bf16.mxu0 %v1558
      %1584 = vmatpush1.bf16.msra.mxu0 %v1557
      %1585 = vmatprep.subr.bf16.mxu0 %v1556
      %1586 = vmatpush1.bf16.msra.mxu0 %v1555
      %1587 = vmatprep.subr.bf16.mxu0 %v1554
      %1588 = vmatpush1.bf16.msra.mxu0 %v1553
      %1589 = vmatprep.subr.bf16.mxu0 %v1552
      %1590 = vmatpush1.bf16.msra.mxu0 %v1551
      %1591 = vmatprep.subr.bf16.mxu0 0
      %1592 = vmatpush2.bf16.msra.mxu0 0
      %1593 = vmatprep.subr.bf16.mxu0 0
      %1594 = vmatpush2.bf16.msra.mxu0 0
      %1595 = vmatprep.subr.bf16.mxu0 0
      %1596 = vmatpush2.bf16.msra.mxu0 0
      %1597 = vmatprep.subr.bf16.mxu0 0
      %1598 = vmatpush2.bf16.msra.mxu0 0
      %1599 = vmatprep.subr.bf16.mxu0 0
      %1600 = vmatpush2.bf16.msra.mxu0 0
      %1601 = vmatprep.subr.bf16.mxu0 0
      %1602 = vmatpush2.bf16.msra.mxu0 0
      %1603 = vmatprep.subr.bf16.mxu0 0
      %1604 = vmatpush2.bf16.msra.mxu0 0
      %1605 = vmatprep.subr.bf16.mxu0 0
      %1606 = vmatpush2.bf16.msra.mxu0 0
      %1607 = vmatprep.mubr.bf16.mxu0 0
      %1608 = vmatmul.mubr.bf16.gmra.mxu0 %v1567
      %v1609 = vpop.f32.mrf.mxu0
      %v1610 = vadd.f32 %v1564, %v1609
      %v1611 = vpop.f32.mrf.mxu0
      %v1612 = vadd.f32 %v1564, %v1611
      %v1613 = vpop.f32.mrf.mxu0
      %v1614 = vpop.f32.mrf.mxu0
      %1615 = vdwg.mxu0
      %v1616 = vadd.f32 %v1610, %v677
      %v1617 = vadd.f32 %v1612, %v678
      %v1618 = vld [vmem:[%s6] sm:$0xff]
      %v1619 = vld [vmem:[%s6 + $0x8] sm:$0xff]
      %v1620 = vld [vmem:[%s6 + $0x10] sm:$0xff]
      %v1621 = vld [vmem:[%s6 + $0x18] sm:$0xff]
      %v1622 = vld [vmem:[%s6 + $0x20] sm:$0xff]
      %v1623 = vld [vmem:[%s6 + $0x28] sm:$0xff]
      %v1624 = vld [vmem:[%s6 + $0x30] sm:$0xff]
      %v1625 = vld [vmem:[%s6 + $0x38] sm:$0xff]
      %v1626 = vld [vmem:[%s6 + $0x40] sm:$0xff]
      %v1627 = vld [vmem:[#allocation2] sm:$0x1]
      %1630 = vrot.lane.b32.xlu0 %v1616, 17
      %v1631 = vpop.permute.xlu0 %1630
      %1632 = vrot.lane.b32.xlu0 %v1617, 17
      %v1633 = vpop.permute.xlu0 %1632
      %v1634 = vsel %vm323, %v1631, %v1633
      %v1638 = vsel %vm323, 0.0, %v1631
      %v1639 = vsel %vm323, %v1633, 0.0
      %v1640 = vmul.f32 %v1638, %v334
      %v1641 = vmul.f32 %v1634, %v338
      %v1642 = vmul.f32 %v1638, %v353
      %v1643 = vmul.f32 %v1634, %v357
      %v1644 = vmul.f32 %v1639, %v355
      %v1645 = vmul.f32 %v1638, %v365
      %v1646 = vmul.f32 %v1634, %v369
      %v1647 = vmul.f32 %v1639, %v367
      %v1648 = vmul.f32 %v1638, %v377
      %v1649 = vmul.f32 %v1634, %v381
      %v1650 = vmul.f32 %v1639, %v379
      %v1651 = vmul.f32 %v1638, %v389
      %v1652 = vmul.f32 %v1634, %v393
      %v1653 = vmul.f32 %v1639, %v391
      %v1654 = vmul.f32 %v1638, %v401
      %v1655 = vmul.f32 %v1634, %v405
      %v1656 = vmul.f32 %v1639, %v403
      %1659 = vrot.lane.b32.xlu0 %v1638, 127
      %v1660 = vpop.permute.xlu0 %1659
      %1661 = vrot.lane.b32.xlu0 %v1634, 127
      %v1662 = vpop.permute.xlu0 %1661
      %1663 = vrot.lane.b32.xlu0 %v1639, 127
      %v1664 = vpop.permute.xlu0 %1663
      %v1665 = vsel %vm457, %v1660, %v1662
      %v1666 = vsel %vm457, %v1662, %v1664
      %1672 = vrot.lane.b32.xlu0 %v1642, 126
      %v1673 = vpop.permute.xlu0 %1672
      %1674 = vrot.lane.b32.xlu0 %v1643, 126
      %v1675 = vpop.permute.xlu0 %1674
      %1676 = vrot.lane.b32.xlu0 %v1644, 126
      %v1677 = vpop.permute.xlu0 %1676
      %v1678 = vsel %vm492, %v1673, %v1675
      %v1679 = vsel %vm492, %v1675, %v1677
      %1685 = vrot.lane.b32.xlu0 %v1645, 112
      %v1686 = vpop.permute.xlu0 %1685
      %1687 = vrot.lane.b32.xlu0 %v1646, 112
      %v1688 = vpop.permute.xlu0 %1687
      %1689 = vrot.lane.b32.xlu0 %v1647, 112
      %v1690 = vpop.permute.xlu0 %1689
      %v1691 = vsel %vm527, %v1686, %v1688
      %v1692 = vsel %vm527, %v1688, %v1690
      %1698 = vrot.lane.b32.xlu0 %v1648, 110
      %v1699 = vpop.permute.xlu0 %1698
      %1700 = vrot.lane.b32.xlu0 %v1649, 110
      %v1701 = vpop.permute.xlu0 %1700
      %1702 = vrot.lane.b32.xlu0 %v1650, 110
      %v1703 = vpop.permute.xlu0 %1702
      %v1704 = vsel %vm572, %v1699, %v1701
      %v1705 = vsel %vm572, %v1701, %v1703
      %1711 = vrot.lane.b32.xlu0 %v1651, 96
      %v1712 = vpop.permute.xlu0 %1711
      %1713 = vrot.lane.b32.xlu0 %v1652, 96
      %v1714 = vpop.permute.xlu0 %1713
      %1715 = vrot.lane.b32.xlu0 %v1653, 96
      %v1716 = vpop.permute.xlu0 %1715
      %v1717 = vsel %vm607, %v1712, %v1714
      %v1718 = vsel %vm607, %v1714, %v1716
      %1721 = vrot.lane.b32.xlu0 %v1638, 95
      %v1722 = vpop.permute.xlu0 %1721
      %1723 = vrot.lane.b32.xlu0 %v1634, 95
      %v1724 = vpop.permute.xlu0 %1723
      %1725 = vrot.lane.b32.xlu0 %v1639, 95
      %v1726 = vpop.permute.xlu0 %1725
      %v1727 = vsel %vm630, %v1722, %v1724
      %v1728 = vsel %vm630, %v1724, %v1726
      %1734 = vrot.lane.b32.xlu0 %v1654, 94
      %v1735 = vpop.permute.xlu0 %1734
      %1736 = vrot.lane.b32.xlu0 %v1655, 94
      %v1737 = vpop.permute.xlu0 %1736
      %1738 = vrot.lane.b32.xlu0 %v1656, 94
      %v1739 = vpop.permute.xlu0 %1738
      %v1740 = vsel %vm665, %v1735, %v1737
      %v1741 = vsel %vm665, %v1737, %v1739
      %1745 = vset.pattern.permute.xlu0 0
      %1746 = vperm.xlu0 %1745, %v1618
      %v1747 = vpop.permute.xlu0 %1746
      %1750 = vset.pattern.permute.xlu0 0
      %1751 = vperm.xlu0 %1750, %v1619
      %v1752 = vpop.permute.xlu0 %1751
      %1755 = vset.pattern.permute.xlu0 0
      %1756 = vperm.xlu0 %1755, %v1620
      %v1757 = vpop.permute.xlu0 %1756
      %1760 = vset.pattern.permute.xlu0 0
      %1761 = vperm.xlu0 %1760, %v1621
      %v1762 = vpop.permute.xlu0 %1761
      %1765 = vset.pattern.permute.xlu0 0
      %1766 = vperm.xlu0 %1765, %v1622
      %v1767 = vpop.permute.xlu0 %1766
      %1770 = vset.pattern.permute.xlu0 0
      %1771 = vperm.xlu0 %1770, %v1623
      %v1772 = vpop.permute.xlu0 %1771
      %1775 = vset.pattern.permute.xlu0 0
      %1776 = vperm.xlu0 %1775, %v1624
      %v1777 = vpop.permute.xlu0 %1776
      %1780 = vset.pattern.permute.xlu0 0
      %1781 = vperm.xlu0 %1780, %v1625
      %v1782 = vpop.permute.xlu0 %1781
      %1785 = vset.pattern.permute.xlu0 0
      %1786 = vperm.xlu0 %1785, %v1626
      %v1787 = vpop.permute.xlu0 %1786
      %v1789 = vmul.f32 %v1640, %v1747
      %v1790 = vmul.f32 %v1641, %v1747
      %v1791 = vmul.f32 %v1665, %v1752
      %v1792 = vmul.f32 %v1666, %v1752
      %v1793 = vmul.f32 %v1678, %v1757
      %v1794 = vmul.f32 %v1679, %v1757
      %v1795 = vmul.f32 %v1691, %v1762
      %v1796 = vmul.f32 %v1692, %v1762
      %v1797 = vmul.f32 %v1616, %v1767
      %v1798 = vmul.f32 %v1617, %v1767
      %v1799 = vmul.f32 %v1704, %v1772
      %v1800 = vmul.f32 %v1705, %v1772
      %v1801 = vmul.f32 %v1717, %v1777
      %v1802 = vmul.f32 %v1718, %v1777
      %v1803 = vmul.f32 %v1727, %v1782
      %v1804 = vmul.f32 %v1728, %v1782
      %v1805 = vmul.f32 %v1740, %v1787
      %v1806 = vmul.f32 %v1741, %v1787
      %v1807 = vadd.f32 %v1789, %v1791
      %v1808 = vadd.f32 %v1807, %v1793
      %v1809 = vadd.f32 %v1808, %v1795
      %v1810 = vadd.f32 %v1809, %v1797
      %v1811 = vadd.f32 %v1810, %v1799
      %v1812 = vadd.f32 %v1811, %v1801
      %v1813 = vadd.f32 %v1812, %v1803
      %v1814 = vadd.f32 %v1813, %v1805
      %v1815 = vrot.slane %v1814, 4
      %v1816 = vadd.f32 %v1814, %v1815
      %v1817 = vrot.slane %v1816, 2
      %v1818 = vadd.f32 %v1816, %v1817
      %v1819 = vrot.slane %v1818, 1
      %v1820 = vadd.f32 %v1818, %v1819
      %v1821 = vadd.f32 %v1790, %v1792
      %v1822 = vadd.f32 %v1821, %v1794
      %v1823 = vadd.f32 %v1822, %v1796
      %v1824 = vadd.f32 %v1823, %v1798
      %v1825 = vadd.f32 %v1824, %v1800
      %v1826 = vadd.f32 %v1825, %v1802
      %v1827 = vadd.f32 %v1826, %v1804
      %v1828 = vadd.f32 %v1827, %v1806
      %v1829 = vrot.slane %v1828, 4
      %v1830 = vadd.f32 %v1828, %v1829
      %v1831 = vrot.slane %v1830, 2
      %v1832 = vadd.f32 %v1830, %v1831
      %v1833 = vrot.slane %v1832, 1
      %v1834 = vadd.f32 %v1832, %v1833
      %1836 = vset.pattern.permute.xlu0 0
      %1837 = vperm.xlu0 %1836, %v1627
      %v1838 = vpop.permute.xlu0 %1837
      %v1840 = vlaneseq
      %v1841 = vshrl.u32 %v1840, 7
      %v1842 = vsub.s32 0, %v1841
      %v1843 = vrot.slane %v1838, %v1842
      %v1844 = vadd.f32 %v1820, %v1843
      %v1845 = vadd.f32 %v1834, %v1843
      %v1848 = vcombine.low %v1844, %v1845
      %v1850 = vunpack.c.l.s4 1966171168
      %v1851 = vunpack.c.0.s8 %v1850
      %v1852 = vlaneseq
      %v1853 = vshrl.u32 %v1852, 7
      %v1854 = vsub.s32 %v1851, %v1853
      %v1855 = vrot.slane %v1848, %v1854
      %v1857 = vunpack.c.l.s4 1966171168
      %v1858 = vunpack.c.0.s8 %v1857
      %v1859 = vlaneseq
      %v1860 = vshrl.u32 %v1859, 7
      %v1861 = vsub.s32 %v1858, %v1860
      %v1862 = vrot.slane %v1855, %v1861
      %v1864 = vlaneseq
      %vm1865 = vcmp.ge.s32.totalorder %v1864, 0
      %vm1866 = vcmp.lt.s32.totalorder %v1864, 256
      %vm1867 = vmand %vm1865, %vm1866
      %1868 = vst.msk [vmem:[%s302] sm:$0x3] %vm1867, %v1862
      %p1869 = scmp.lt.s32.totalorder %s21, 1
      %s1870 = scalar_select %p1869, %s21, 1
      %s1871 = smul.addr %s1870, 2
      %s1872 = scalar_lea.vmem %s8, %s1871
      // Predicated region
      $region53: #{edsr_forward.1} parent=51 // pred_check
        %p1873 = pneg %p212
      $region54: #{edsr_forward.1} parent=51 // pred_check_branch
        %1875 = sbr.rel (%p1873) target = $region56
      $region55: #{edsr_forward.1} parent=51 // pred_region
        _
      $region56: #{edsr_forward.1} parent=51 // pred_fallthru
        _
    $region52: #{edsr_forward.1} parent=5 // pred_fallthru
      _
    %p1876 = scmp.le.s32.totalorder 2, %s16
    // Predicated region
    $region57: #{edsr_forward.1} parent=5 // pred_check
      %p1877 = pneg %p1876
    $region58: #{edsr_forward.1} parent=5 // pred_check_branch
      %1879 = sbr.rel (%p1877) target = $region60
    $region59: #{edsr_forward.1} parent=5 // pred_region
      %s1880 = ssub.s32 %s16, 2
      // Predicated region
      $region61: #{edsr_forward.1} parent=59 // pred_check
        %p1881 = pneg %p218
      $region62: #{edsr_forward.1} parent=59 // pred_check_branch
        %1883 = sbr.rel (%p1881) target = $region64
      $region63: #{edsr_forward.1} parent=59 // pred_region
        %p1884 = scmp.lt.s32.totalorder %s22, 1
        %s1885 = scalar_select %p1884, %s22, 1
        %s1886 = smul.addr %s1885, 2
        %s1887 = scalar_lea.vmem %s8, %s1886
      $region64: #{edsr_forward.1} parent=59 // pred_fallthru
        _
    $region60: #{edsr_forward.1} parent=5 // pred_fallthru
      _
  $region6: #{edsr_forward.1} parent=0 // loop_footer
    %s20 = sadd.s32 1, %s16
  $region7: #{edsr_forward.1} parent=0 // loop_footer_branch
    %15 = sbr.rel target = $region3
  $region8: #{edsr_forward.1} parent=0 // loop_exit
    _

</llo_original>
